<compile_context>
chip_gen: v5e
topology: v5e:2x2
jax: 0.10.0
libtpu: 0.0.40
codegen_flags: <defaults>
</compile_context>

<pallas_src>
import functools

import jax
import jax.numpy as jnp
from jax import lax
from jax.experimental import pallas as pl
from jax.experimental.pallas import tpu as pltpu


# ----------------------------------------------------------------------------
# In-kernel helpers
# ----------------------------------------------------------------------------
def _gelu_tanh(x):
    # tanh-form GELU: EUP tanh on the otherwise-idle transcendental slot.
    # |err| vs exact-erf GELU ~1e-3, far below the bf16 matmul noise floor.
    c = 0.7978845608028654  # sqrt(2/pi)
    return 0.5 * x * (1.0 + jnp.tanh(c * (x + 0.044715 * x * x * x)))


def _layernorm(x, gamma, beta, eps=1e-5):
    mu = jnp.mean(x, axis=-1, keepdims=True)
    xc = x - mu
    var = jnp.mean(xc * xc, axis=-1, keepdims=True)
    return xc * lax.rsqrt(var + eps) * gamma + beta


# ----------------------------------------------------------------------------
# Fused per-batch-block encoder kernel
# ----------------------------------------------------------------------------
def _encoder_kernel(xq_ref, xk_ref, xv_ref,
                    wqkv_ref, wo_ref, vecd_ref, w1_ref, b1_ref, w2_ref,
                    o_ref, *, num_heads, scale, bblk):
    _, D, S = xq_ref.shape                     # block is (Bblk, D, S), NCHW tokens
    hd = D // num_heads
    M = bblk * S

    def tokens(ref):
        # (Bblk, D, S) channel-major block -> (Bblk*S, D) token rows, f32.
        # XLU transpose; hidden under the DMA/MXU prologue.
        return jnp.transpose(ref[...], (0, 2, 1)).reshape(M, D)

    xq = tokens(xq_ref)                        # f32 — feeds residual-1 exactly
    xk = tokens(xk_ref)
    xv = tokens(xv_ref)

    wq, wk, wv = wqkv_ref[0], wqkv_ref[1], wqkv_ref[2]          # (D, D) bf16
    vecd = vecd_ref[...]                                        # (9, D) f32
    bq, bk, bv, bo = vecd[0:1], vecd[1:2], vecd[2:3], vecd[3:4]
    g1, be1, g2, be2 = vecd[4:5], vecd[5:6], vecd[6:7], vecd[7:8]
    b2 = vecd[8:9]

    # Full-width projections, batch folded into M.  PyTorch does
    # q = q*scale; q = self.q(q)  ->  (x*scale)@Wq + bq  (bias NOT scaled).
    qp = jnp.dot(xq.astype(jnp.bfloat16), wq, preferred_element_type=jnp.float32) * scale + bq
    kp = jnp.dot(xk.astype(jnp.bfloat16), wk, preferred_element_type=jnp.float32) + bk
    vp = jnp.dot(xv.astype(jnp.bfloat16), wv, preferred_element_type=jnp.float32) + bv
    qp16 = qp.astype(jnp.bfloat16)
    kp16 = kp.astype(jnp.bfloat16)
    vp16 = vp.astype(jnp.bfloat16)

    # Per-batch-item, per-head attention; heads concatenated lane-wise so the
    # output projection is a single K=D matmul.
    batch_rows = []
    for bi in range(bblk):                                       # static unroll
        r0 = bi * S
        q_b = qp16[r0:r0 + S]
        k_b = kp16[r0:r0 + S]
        v_b = vp16[r0:r0 + S]
        head_outs = []
        for h in range(num_heads):                               # static unroll
            sl = slice(h * hd, (h + 1) * hd)
            s = lax.dot_general(q_b[:, sl], k_b[:, sl], (((1,), (1,)), ((), ())),
                                preferred_element_type=jnp.float32)       # (S, S)
            s = s - jnp.max(s, axis=-1, keepdims=True)
            p = jnp.exp(s)
            p = p * pl.reciprocal(jnp.sum(p, axis=-1, keepdims=True), approx=True)
            head_outs.append(jnp.dot(p.astype(jnp.bfloat16), v_b[:, sl],
                                     preferred_element_type=jnp.float32))  # (S, hd)
        batch_rows.append(jnp.concatenate(head_outs, axis=-1))             # (S, D)
    attn_cat = batch_rows[0] if bblk == 1 else jnp.concatenate(batch_rows, axis=0)
    attn = jnp.dot(attn_cat.astype(jnp.bfloat16), wo_ref[...],
                   preferred_element_type=jnp.float32) + bo                 # (M, D)

    # residual 1 (true f32 input) + norm1
    src = _layernorm(xq + attn, g1, be1)

    # MLP: fc1 -> tanh-GELU -> fc2 (bf16 MXU, f32 epilogue); dropout = identity (eval)
    h1 = jnp.dot(src.astype(jnp.bfloat16), w1_ref[...],
                 preferred_element_type=jnp.float32) + b1_ref[...]
    h1 = _gelu_tanh(h1)
    y = jnp.dot(h1.astype(jnp.bfloat16), w2_ref[...],
                preferred_element_type=jnp.float32) + b2

    # residual 2 + norm2
    src = _layernorm(src + y, g2, be2)

    # Store lane-dense in NCHW token layout: (Bblk, D, S).
    o_ref[...] = jnp.transpose(src.reshape(bblk, S, D), (0, 2, 1)).astype(o_ref.dtype)


# ----------------------------------------------------------------------------
# Wrapper
# ----------------------------------------------------------------------------
def _pick_bblk(batch, seq):
    # Fill the MXU M dimension (aim Bblk*S >= 256) while keeping >= 2 grid steps
    # (both v7x TensorCores get work) and Bblk | batch.
    target = max(1, -(-256 // seq))
    best = 1
    for d in range(1, batch + 1):
        if batch % d or d > target:
            continue
        if batch // d >= 2 or batch == 1:
            best = d
    return best


def _vmem_limit_bytes(bblk, S, D, HID):
    m = bblk * S
    toks = 4 * bblk * D * S * 4 * 2                               # q,k,v,out f32 double-buffered
    wts = 2 * ((3 * D * D + D * D + D * HID + HID * D) * 2 + (9 * D + HID) * 4)
    interm = 10 * m * max(D, HID) * 4 + 8 * S * S * 4
    est = toks + wts + interm
    # Never claim all of v7x's 64 MiB physical VMEM; 32 MiB cap is safe on all gens.
    return int(min(max(2 * est, 8 << 20), 32 << 20))


def transformer_encoder_ensem2(q_nchw, k_nchw, v_nchw, params, num_heads):
    b, c, hh, ww = q_nchw.shape
    S, D = hh * ww, c
    assert D % num_heads == 0
    hd = D // num_heads
    HID = params["w1"].shape[1]

    bblk = _pick_bblk(b, S)
    grid = (b // bblk,)

    # Free reshape only: NCHW -> (B, C, S).  No transpose / cast pass over HBM.
    xq = q_nchw.reshape(b, c, S)
    xk = k_nchw.reshape(b, c, S)
    xv = v_nchw.reshape(b, c, S)

    # Weight packing: bf16 for MXU operands, one stacked (9, D) f32 array for all
    # D-sized vector params, fc1 bias separate (HID-sized).
    wqkv = jnp.stack([params["wq"], params["wk"], params["wv"]]).astype(jnp.bfloat16)   # (3, D, D)
    wo = params["wo"].astype(jnp.bfloat16)                                              # (D, D)
    vecd = jnp.stack([params["bq"], params["bk"], params["bv"], params["bo"],
                      params["ln1_g"], params["ln1_b"],
                      params["ln2_g"], params["ln2_b"],
                      params["b2"]]).astype(jnp.float32)                                # (9, D)
    w1 = params["w1"].astype(jnp.bfloat16)                                              # (D, HID)
    b1 = params["b1"].reshape(1, HID).astype(jnp.float32)
    w2 = params["w2"].astype(jnp.bfloat16)                                              # (HID, D)

    tok_spec = pl.BlockSpec((bblk, D, S), lambda i: (i, 0, 0))
    const = lambda shape: pl.BlockSpec(shape, lambda i, _s=shape: tuple(0 for _ in _s))

    out_bcs = pl.pallas_call(
        functools.partial(_encoder_kernel, num_heads=num_heads,
                          scale=float(hd) ** (-0.5), bblk=bblk),
        out_shape=jax.ShapeDtypeStruct((b, D, S), jnp.float32),
        grid_spec=pltpu.PrefetchScalarGridSpec(
            num_scalar_prefetch=0,
            grid=grid,
            in_specs=[
                tok_spec, tok_spec, tok_spec,      # q, k, v  (B, C, S) f32
                const((3, D, D)),                  # wq, wk, wv
                const((D, D)),                     # wo
                const((9, D)),                     # packed D-sized vector params
                const((D, HID)), const((1, HID)),  # fc1
                const((HID, D)),                   # fc2
            ],
            out_specs=tok_spec,
        ),
        compiler_params=pltpu.CompilerParams(
            dimension_semantics=("parallel",),
            vmem_limit_bytes=_vmem_limit_bytes(bblk, S, D, HID)),
    )(xq, xk, xv, wqkv, wo, vecd, w1, b1, w2)

    # (B, D, S) is already NCHW token order: free reshape to (B, C, H, W).
    return out_bcs.reshape(b, c, hh, ww)


# ----------------------------------------------------------------------------
# Pure-JAX f32 reference (for correctness check in __main__)
# ----------------------------------------------------------------------------
def _reference(q_nchw, k_nchw, v_nchw, params, num_heads):
    b, c, hh, ww = q_nchw.shape
    S, D = hh * ww, c
    hd = D // num_heads
    scale = float(hd) ** (-0.5)
    tk = lambda x: x.reshape(b, c, S).transpose(0, 2, 1)
    xq, xk, xv = tk(q_nchw), tk(k_nchw), tk(v_nchw)
    q = (xq * scale) @ params["wq"] + params["bq"]
    k = xk @ params["wk"] + params["bk"]
    v = xv @ params["wv"] + params["bv"]
    split = lambda t: t.reshape(b, S, num_heads, hd).transpose(0, 2, 1, 3)
    qh, kh, vh = split(q), split(k), split(v)
    s = jnp.einsum("bhqd,bhkd->bhqk", qh, kh)
    p = jax.nn.softmax(s, axis=-1)
    o = jnp.einsum("bhqk,bhkd->bhqd", p, vh).transpose(0, 2, 1, 3).reshape(b, S, D)
    attn = o @ params["wo"] + params["bo"]

    def ln(x, g, bb):
        mu = x.mean(-1, keepdims=True)
        var = ((x - mu) ** 2).mean(-1, keepdims=True)
        return (x - mu) * jax.lax.rsqrt(var + 1e-5) * g + bb

    src = ln(xq + attn, params["ln1_g"], params["ln1_b"])
    h1 = jax.nn.gelu(src @ params["w1"] + params["b1"], approximate=False)
    y = h1 @ params["w2"] + params["b2"]
    src = ln(src + y, params["ln2_g"], params["ln2_b"])
    return src.transpose(0, 2, 1).reshape(b, c, hh, ww)


# ----------------------------------------------------------------------------
# Deterministic synthetic parameters (shapes follow the module __init__).
# Linear weights stored pre-transposed as (in_features, out_features).
# ----------------------------------------------------------------------------
def init_params(key, dim, mlp_ratio=4):
    hid = int(dim * mlp_ratio)
    keys = jax.random.split(key, 11)
    std = 0.02
    w = lambda k, shape: std * jax.random.normal(k, shape, jnp.float32)
    return {
        "wq": w(keys[0], (dim, dim)), "bq": w(keys[1], (dim,)),
        "wk": w(keys[2], (dim, dim)), "bk": w(keys[3], (dim,)),
        "wv": w(keys[4], (dim, dim)), "bv": w(keys[5], (dim,)),
        "wo": w(keys[6], (dim, dim)), "bo": jnp.zeros((dim,), jnp.float32),
        "w1": w(keys[7], (dim, hid)), "b1": w(keys[8], (hid,)),
        "w2": w(keys[9], (hid, dim)), "b2": w(keys[10], (dim,)),
        "ln1_g": jnp.ones((dim,), jnp.float32), "ln1_b": jnp.zeros((dim,), jnp.float32),
        "ln2_g": jnp.ones((dim,), jnp.float32), "ln2_b": jnp.zeros((dim,), jnp.float32),
    }


if __name__ == "__main__":
    key = jax.random.PRNGKey(0)
    b, c, h, w = 2, 32, 8, 8          # dim = 32, seq = h*w = 64, hidden = 128
    num_heads = 4                     # head_dim = 8
    kq, kk, kv, kp = jax.random.split(key, 4)
    q = jax.random.normal(kq, (b, c, h, w), jnp.float32)
    k = jax.random.normal(kk, (b, c, h, w), jnp.float32)
    v = jax.random.normal(kv, (b, c, h, w), jnp.float32)
    params = init_params(kp, dim=c, mlp_ratio=4)

    out = transformer_encoder_ensem2(q, k, v, params, num_heads=num_heads)
    out = jax.block_until_ready(out)
    assert out.shape == (b, c, h, w), out.shape
    assert bool(jnp.all(jnp.isfinite(out)))

    ref = _reference(q, k, v, params, num_heads)
    max_err = float(jnp.max(jnp.abs(out - ref)))
    assert max_err < 0.1, f"max abs err vs f32 reference: {max_err}"
    print("KERNEL_OK")
</pallas_src>

<mosaic_0001>
module attributes {stable_mosaic.version = 11 : i64} {
  func.func @_encoder_kernel(%arg0: i32, %arg1: memref<1x32x64xf32, #tpu.memory_space<vmem>>, %arg2: memref<1x32x64xf32, #tpu.memory_space<vmem>>, %arg3: memref<1x32x64xf32, #tpu.memory_space<vmem>>, %arg4: memref<3x32x32xbf16, #tpu.memory_space<vmem>>, %arg5: memref<32x32xbf16, #tpu.memory_space<vmem>>, %arg6: memref<9x32xf32, #tpu.memory_space<vmem>>, %arg7: memref<32x128xbf16, #tpu.memory_space<vmem>>, %arg8: memref<1x128xf32, #tpu.memory_space<vmem>>, %arg9: memref<128x32xbf16, #tpu.memory_space<vmem>>, %arg10: memref<1x32x64xf32, #tpu.memory_space<vmem>>) attributes {dimension_semantics = [#tpu.dimension_semantics<parallel>], iteration_bounds = array<i64: 2>, scalar_prefetch = 0 : i64, scratch_operands = 0 : i64, tpu.core_type = #tpu.core_type<tc>, window_params = [{transform_indices = @transform_0, window_bounds = array<i64: 1, 32, 64>}, {transform_indices = @transform_1, window_bounds = array<i64: 1, 32, 64>}, {transform_indices = @transform_2, window_bounds = array<i64: 1, 32, 64>}, {pipeline_mode = #tpu.pipeline_mode<synchronous>, transform_indices = @transform_3, window_bounds = array<i64: 3, 32, 32>}, {pipeline_mode = #tpu.pipeline_mode<synchronous>, transform_indices = @transform_4, window_bounds = array<i64: 32, 32>}, {pipeline_mode = #tpu.pipeline_mode<synchronous>, transform_indices = @transform_5, window_bounds = array<i64: 9, 32>}, {pipeline_mode = #tpu.pipeline_mode<synchronous>, transform_indices = @transform_6, window_bounds = array<i64: 32, 128>}, {pipeline_mode = #tpu.pipeline_mode<synchronous>, transform_indices = @transform_7, window_bounds = array<i64: 1, 128>}, {pipeline_mode = #tpu.pipeline_mode<synchronous>, transform_indices = @transform_8, window_bounds = array<i64: 128, 32>}, {transform_indices = @transform_9, window_bounds = array<i64: 1, 32, 64>}]} {
    %c0 = arith.constant 0 : index
    %c0_0 = arith.constant 0 : index
    %c0_1 = arith.constant 0 : index
    %0 = vector.load %arg1[%c0, %c0_0, %c0_1] : memref<1x32x64xf32, #tpu.memory_space<vmem>>, vector<1x32x64xf32>
    %1 = tpu.transpose %0, [0, 2, 1] : vector<1x32x64xf32> -> vector<1x64x32xf32>
    %2 = vector.shape_cast %1 : vector<1x64x32xf32> to vector<64x32xf32>
    %c0_2 = arith.constant 0 : index
    %c0_3 = arith.constant 0 : index
    %c0_4 = arith.constant 0 : index
    %3 = vector.load %arg2[%c0_2, %c0_3, %c0_4] : memref<1x32x64xf32, #tpu.memory_space<vmem>>, vector<1x32x64xf32>
    %4 = tpu.transpose %3, [0, 2, 1] : vector<1x32x64xf32> -> vector<1x64x32xf32>
    %5 = vector.shape_cast %4 : vector<1x64x32xf32> to vector<64x32xf32>
    %c0_5 = arith.constant 0 : index
    %c0_6 = arith.constant 0 : index
    %c0_7 = arith.constant 0 : index
    %6 = vector.load %arg3[%c0_5, %c0_6, %c0_7] : memref<1x32x64xf32, #tpu.memory_space<vmem>>, vector<1x32x64xf32>
    %7 = tpu.transpose %6, [0, 2, 1] : vector<1x32x64xf32> -> vector<1x64x32xf32>
    %8 = vector.shape_cast %7 : vector<1x64x32xf32> to vector<64x32xf32>
    %c0_8 = arith.constant 0 : index
    %c0_9 = arith.constant 0 : index
    %c0_10 = arith.constant 0 : index
    %9 = vector.load %arg4[%c0_8, %c0_9, %c0_10] : memref<3x32x32xbf16, #tpu.memory_space<vmem>>, vector<1x32x32xbf16>
    %10 = vector.shape_cast %9 : vector<1x32x32xbf16> to vector<32x32xbf16>
    %c1 = arith.constant 1 : index
    %c0_11 = arith.constant 0 : index
    %c0_12 = arith.constant 0 : index
    %11 = vector.load %arg4[%c1, %c0_11, %c0_12] : memref<3x32x32xbf16, #tpu.memory_space<vmem>>, vector<1x32x32xbf16>
    %12 = vector.shape_cast %11 : vector<1x32x32xbf16> to vector<32x32xbf16>
    %c2 = arith.constant 2 : index
    %c0_13 = arith.constant 0 : index
    %c0_14 = arith.constant 0 : index
    %13 = vector.load %arg4[%c2, %c0_13, %c0_14] : memref<3x32x32xbf16, #tpu.memory_space<vmem>>, vector<1x32x32xbf16>
    %14 = vector.shape_cast %13 : vector<1x32x32xbf16> to vector<32x32xbf16>
    %c0_15 = arith.constant 0 : index
    %c0_16 = arith.constant 0 : index
    %15 = vector.load %arg6[%c0_15, %c0_16] : memref<9x32xf32, #tpu.memory_space<vmem>>, vector<9x32xf32>
    %16 = vector.extract_strided_slice %15 {offsets = [0, 0], sizes = [1, 32], strides = [1, 1]} : vector<9x32xf32> to vector<1x32xf32>
    %17 = vector.extract_strided_slice %15 {offsets = [1, 0], sizes = [1, 32], strides = [1, 1]} : vector<9x32xf32> to vector<1x32xf32>
    %18 = vector.extract_strided_slice %15 {offsets = [2, 0], sizes = [1, 32], strides = [1, 1]} : vector<9x32xf32> to vector<1x32xf32>
    %19 = vector.extract_strided_slice %15 {offsets = [3, 0], sizes = [1, 32], strides = [1, 1]} : vector<9x32xf32> to vector<1x32xf32>
    %20 = vector.extract_strided_slice %15 {offsets = [4, 0], sizes = [1, 32], strides = [1, 1]} : vector<9x32xf32> to vector<1x32xf32>
    %21 = vector.extract_strided_slice %15 {offsets = [5, 0], sizes = [1, 32], strides = [1, 1]} : vector<9x32xf32> to vector<1x32xf32>
    %22 = vector.extract_strided_slice %15 {offsets = [6, 0], sizes = [1, 32], strides = [1, 1]} : vector<9x32xf32> to vector<1x32xf32>
    %23 = vector.extract_strided_slice %15 {offsets = [7, 0], sizes = [1, 32], strides = [1, 1]} : vector<9x32xf32> to vector<1x32xf32>
    %24 = vector.extract_strided_slice %15 {offsets = [8, 0], sizes = [1, 32], strides = [1, 1]} : vector<9x32xf32> to vector<1x32xf32>
    %25 = arith.truncf %2 : vector<64x32xf32> to vector<64x32xbf16>
    %cst = arith.constant dense<0.000000e+00> : vector<64x32xf32>
    %26 = tpu.matmul %25, %10, %cst {dimension_numbers = #tpu.dot_dimension_numbers<[1], [0], [0], [1], [0, 0, 1, 1], [], []>} : vector<64x32xbf16>, vector<32x32xbf16>, vector<64x32xf32> -> vector<64x32xf32>
    %cst_17 = arith.constant 0.353553385 : f32
    %27 = vector.broadcast %cst_17 : f32 to vector<64x32xf32>
    %28 = arith.mulf %26, %27 : vector<64x32xf32>
    %29 = vector.broadcast %16 : vector<1x32xf32> to vector<64x32xf32>
    %30 = arith.addf %28, %29 : vector<64x32xf32>
    %31 = arith.truncf %5 : vector<64x32xf32> to vector<64x32xbf16>
    %cst_18 = arith.constant dense<0.000000e+00> : vector<64x32xf32>
    %32 = tpu.matmul %31, %12, %cst_18 {dimension_numbers = #tpu.dot_dimension_numbers<[1], [0], [0], [1], [0, 0, 1, 1], [], []>} : vector<64x32xbf16>, vector<32x32xbf16>, vector<64x32xf32> -> vector<64x32xf32>
    %33 = vector.broadcast %17 : vector<1x32xf32> to vector<64x32xf32>
    %34 = arith.addf %32, %33 : vector<64x32xf32>
    %35 = arith.truncf %8 : vector<64x32xf32> to vector<64x32xbf16>
    %cst_19 = arith.constant dense<0.000000e+00> : vector<64x32xf32>
    %36 = tpu.matmul %35, %14, %cst_19 {dimension_numbers = #tpu.dot_dimension_numbers<[1], [0], [0], [1], [0, 0, 1, 1], [], []>} : vector<64x32xbf16>, vector<32x32xbf16>, vector<64x32xf32> -> vector<64x32xf32>
    %37 = vector.broadcast %18 : vector<1x32xf32> to vector<64x32xf32>
    %38 = arith.addf %36, %37 : vector<64x32xf32>
    %39 = arith.truncf %30 : vector<64x32xf32> to vector<64x32xbf16>
    %40 = arith.truncf %34 : vector<64x32xf32> to vector<64x32xbf16>
    %41 = arith.truncf %38 : vector<64x32xf32> to vector<64x32xbf16>
    %42 = vector.extract_strided_slice %39 {offsets = [0, 0], sizes = [64, 8], strides = [1, 1]} : vector<64x32xbf16> to vector<64x8xbf16>
    %43 = vector.extract_strided_slice %40 {offsets = [0, 0], sizes = [64, 8], strides = [1, 1]} : vector<64x32xbf16> to vector<64x8xbf16>
    %cst_20 = arith.constant dense<0.000000e+00> : vector<64x64xf32>
    %44 = tpu.matmul %42, %43, %cst_20 {dimension_numbers = #tpu.dot_dimension_numbers<[1], [1], [0], [0], [0, 0, 1, 0], [], []>} : vector<64x8xbf16>, vector<64x8xbf16>, vector<64x64xf32> -> vector<64x64xf32>
    %cst_21 = arith.constant dense<0xFF800000> : vector<64xf32>
    %45 = vector.multi_reduction <maximumf>, %44, %cst_21 [1] : vector<64x64xf32> to vector<64xf32>
    %46 = vector.shape_cast %45 : vector<64xf32> to vector<64x1xf32>
    %47 = vector.broadcast %46 : vector<64x1xf32> to vector<64x64xf32>
    %48 = arith.subf %44, %47 : vector<64x64xf32>
    %49 = math.exp %48 : vector<64x64xf32>
    %cst_22 = arith.constant dense<0.000000e+00> : vector<64xf32>
    %50 = vector.multi_reduction <add>, %49, %cst_22 [1] : vector<64x64xf32> to vector<64xf32>
    %51 = vector.shape_cast %50 : vector<64xf32> to vector<64x1xf32>
    %52 = tpu.reciprocal %51 {approx = true} : vector<64x1xf32> -> vector<64x1xf32>
    %53 = vector.broadcast %52 : vector<64x1xf32> to vector<64x64xf32>
    %54 = arith.mulf %49, %53 : vector<64x64xf32>
    %55 = arith.truncf %54 : vector<64x64xf32> to vector<64x64xbf16>
    %56 = vector.extract_strided_slice %41 {offsets = [0, 0], sizes = [64, 8], strides = [1, 1]} : vector<64x32xbf16> to vector<64x8xbf16>
    %cst_23 = arith.constant dense<0.000000e+00> : vector<64x8xf32>
    %57 = tpu.matmul %55, %56, %cst_23 {dimension_numbers = #tpu.dot_dimension_numbers<[1], [0], [0], [1], [0, 0, 1, 1], [], []>} : vector<64x64xbf16>, vector<64x8xbf16>, vector<64x8xf32> -> vector<64x8xf32>
    %58 = vector.extract_strided_slice %39 {offsets = [0, 8], sizes = [64, 8], strides = [1, 1]} : vector<64x32xbf16> to vector<64x8xbf16>
    %59 = vector.extract_strided_slice %40 {offsets = [0, 8], sizes = [64, 8], strides = [1, 1]} : vector<64x32xbf16> to vector<64x8xbf16>
    %cst_24 = arith.constant dense<0.000000e+00> : vector<64x64xf32>
    %60 = tpu.matmul %58, %59, %cst_24 {dimension_numbers = #tpu.dot_dimension_numbers<[1], [1], [0], [0], [0, 0, 1, 0], [], []>} : vector<64x8xbf16>, vector<64x8xbf16>, vector<64x64xf32> -> vector<64x64xf32>
    %cst_25 = arith.constant dense<0xFF800000> : vector<64xf32>
    %61 = vector.multi_reduction <maximumf>, %60, %cst_25 [1] : vector<64x64xf32> to vector<64xf32>
    %62 = vector.shape_cast %61 : vector<64xf32> to vector<64x1xf32>
    %63 = vector.broadcast %62 : vector<64x1xf32> to vector<64x64xf32>
    %64 = arith.subf %60, %63 : vector<64x64xf32>
    %65 = math.exp %64 : vector<64x64xf32>
    %cst_26 = arith.constant dense<0.000000e+00> : vector<64xf32>
    %66 = vector.multi_reduction <add>, %65, %cst_26 [1] : vector<64x64xf32> to vector<64xf32>
    %67 = vector.shape_cast %66 : vector<64xf32> to vector<64x1xf32>
    %68 = tpu.reciprocal %67 {approx = true} : vector<64x1xf32> -> vector<64x1xf32>
    %69 = vector.broadcast %68 : vector<64x1xf32> to vector<64x64xf32>
    %70 = arith.mulf %65, %69 : vector<64x64xf32>
    %71 = arith.truncf %70 : vector<64x64xf32> to vector<64x64xbf16>
    %72 = vector.extract_strided_slice %41 {offsets = [0, 8], sizes = [64, 8], strides = [1, 1]} : vector<64x32xbf16> to vector<64x8xbf16>
    %cst_27 = arith.constant dense<0.000000e+00> : vector<64x8xf32>
    %73 = tpu.matmul %71, %72, %cst_27 {dimension_numbers = #tpu.dot_dimension_numbers<[1], [0], [0], [1], [0, 0, 1, 1], [], []>} : vector<64x64xbf16>, vector<64x8xbf16>, vector<64x8xf32> -> vector<64x8xf32>
    %74 = vector.extract_strided_slice %39 {offsets = [0, 16], sizes = [64, 8], strides = [1, 1]} : vector<64x32xbf16> to vector<64x8xbf16>
    %75 = vector.extract_strided_slice %40 {offsets = [0, 16], sizes = [64, 8], strides = [1, 1]} : vector<64x32xbf16> to vector<64x8xbf16>
    %cst_28 = arith.constant dense<0.000000e+00> : vector<64x64xf32>
    %76 = tpu.matmul %74, %75, %cst_28 {dimension_numbers = #tpu.dot_dimension_numbers<[1], [1], [0], [0], [0, 0, 1, 0], [], []>} : vector<64x8xbf16>, vector<64x8xbf16>, vector<64x64xf32> -> vector<64x64xf32>
    %cst_29 = arith.constant dense<0xFF800000> : vector<64xf32>
    %77 = vector.multi_reduction <maximumf>, %76, %cst_29 [1] : vector<64x64xf32> to vector<64xf32>
    %78 = vector.shape_cast %77 : vector<64xf32> to vector<64x1xf32>
    %79 = vector.broadcast %78 : vector<64x1xf32> to vector<64x64xf32>
    %80 = arith.subf %76, %79 : vector<64x64xf32>
    %81 = math.exp %80 : vector<64x64xf32>
    %cst_30 = arith.constant dense<0.000000e+00> : vector<64xf32>
    %82 = vector.multi_reduction <add>, %81, %cst_30 [1] : vector<64x64xf32> to vector<64xf32>
    %83 = vector.shape_cast %82 : vector<64xf32> to vector<64x1xf32>
    %84 = tpu.reciprocal %83 {approx = true} : vector<64x1xf32> -> vector<64x1xf32>
    %85 = vector.broadcast %84 : vector<64x1xf32> to vector<64x64xf32>
    %86 = arith.mulf %81, %85 : vector<64x64xf32>
    %87 = arith.truncf %86 : vector<64x64xf32> to vector<64x64xbf16>
    %88 = vector.extract_strided_slice %41 {offsets = [0, 16], sizes = [64, 8], strides = [1, 1]} : vector<64x32xbf16> to vector<64x8xbf16>
    %cst_31 = arith.constant dense<0.000000e+00> : vector<64x8xf32>
    %89 = tpu.matmul %87, %88, %cst_31 {dimension_numbers = #tpu.dot_dimension_numbers<[1], [0], [0], [1], [0, 0, 1, 1], [], []>} : vector<64x64xbf16>, vector<64x8xbf16>, vector<64x8xf32> -> vector<64x8xf32>
    %90 = vector.extract_strided_slice %39 {offsets = [0, 24], sizes = [64, 8], strides = [1, 1]} : vector<64x32xbf16> to vector<64x8xbf16>
    %91 = vector.extract_strided_slice %40 {offsets = [0, 24], sizes = [64, 8], strides = [1, 1]} : vector<64x32xbf16> to vector<64x8xbf16>
    %cst_32 = arith.constant dense<0.000000e+00> : vector<64x64xf32>
    %92 = tpu.matmul %90, %91, %cst_32 {dimension_numbers = #tpu.dot_dimension_numbers<[1], [1], [0], [0], [0, 0, 1, 0], [], []>} : vector<64x8xbf16>, vector<64x8xbf16>, vector<64x64xf32> -> vector<64x64xf32>
    %cst_33 = arith.constant dense<0xFF800000> : vector<64xf32>
    %93 = vector.multi_reduction <maximumf>, %92, %cst_33 [1] : vector<64x64xf32> to vector<64xf32>
    %94 = vector.shape_cast %93 : vector<64xf32> to vector<64x1xf32>
    %95 = vector.broadcast %94 : vector<64x1xf32> to vector<64x64xf32>
    %96 = arith.subf %92, %95 : vector<64x64xf32>
    %97 = math.exp %96 : vector<64x64xf32>
    %cst_34 = arith.constant dense<0.000000e+00> : vector<64xf32>
    %98 = vector.multi_reduction <add>, %97, %cst_34 [1] : vector<64x64xf32> to vector<64xf32>
    %99 = vector.shape_cast %98 : vector<64xf32> to vector<64x1xf32>
    %100 = tpu.reciprocal %99 {approx = true} : vector<64x1xf32> -> vector<64x1xf32>
    %101 = vector.broadcast %100 : vector<64x1xf32> to vector<64x64xf32>
    %102 = arith.mulf %97, %101 : vector<64x64xf32>
    %103 = arith.truncf %102 : vector<64x64xf32> to vector<64x64xbf16>
    %104 = vector.extract_strided_slice %41 {offsets = [0, 24], sizes = [64, 8], strides = [1, 1]} : vector<64x32xbf16> to vector<64x8xbf16>
    %cst_35 = arith.constant dense<0.000000e+00> : vector<64x8xf32>
    %105 = tpu.matmul %103, %104, %cst_35 {dimension_numbers = #tpu.dot_dimension_numbers<[1], [0], [0], [1], [0, 0, 1, 1], [], []>} : vector<64x64xbf16>, vector<64x8xbf16>, vector<64x8xf32> -> vector<64x8xf32>
    %106 = tpu.concatenate %57, %73, %89, %105 in 1 : vector<64x8xf32>, vector<64x8xf32>, vector<64x8xf32>, vector<64x8xf32> -> vector<64x32xf32>
    %107 = arith.truncf %106 : vector<64x32xf32> to vector<64x32xbf16>
    %c0_36 = arith.constant 0 : index
    %c0_37 = arith.constant 0 : index
    %108 = vector.load %arg5[%c0_36, %c0_37] : memref<32x32xbf16, #tpu.memory_space<vmem>>, vector<32x32xbf16>
    %cst_38 = arith.constant dense<0.000000e+00> : vector<64x32xf32>
    %109 = tpu.matmul %107, %108, %cst_38 {dimension_numbers = #tpu.dot_dimension_numbers<[1], [0], [0], [1], [0, 0, 1, 1], [], []>} : vector<64x32xbf16>, vector<32x32xbf16>, vector<64x32xf32> -> vector<64x32xf32>
    %110 = vector.broadcast %19 : vector<1x32xf32> to vector<64x32xf32>
    %111 = arith.addf %109, %110 : vector<64x32xf32>
    %112 = arith.addf %2, %111 : vector<64x32xf32>
    %cst_39 = arith.constant dense<0.000000e+00> : vector<64xf32>
    %113 = vector.multi_reduction <add>, %112, %cst_39 [1] : vector<64x32xf32> to vector<64xf32>
    %114 = vector.shape_cast %113 : vector<64xf32> to vector<64x1xf32>
    %cst_40 = arith.constant 3.200000e+01 : f32
    %115 = vector.broadcast %cst_40 : f32 to vector<64x1xf32>
    %116 = arith.divf %114, %115 : vector<64x1xf32>
    %117 = vector.broadcast %116 : vector<64x1xf32> to vector<64x32xf32>
    %118 = arith.subf %112, %117 : vector<64x32xf32>
    %119 = arith.mulf %118, %118 : vector<64x32xf32>
    %cst_41 = arith.constant dense<0.000000e+00> : vector<64xf32>
    %120 = vector.multi_reduction <add>, %119, %cst_41 [1] : vector<64x32xf32> to vector<64xf32>
    %121 = vector.shape_cast %120 : vector<64xf32> to vector<64x1xf32>
    %cst_42 = arith.constant 3.200000e+01 : f32
    %122 = vector.broadcast %cst_42 : f32 to vector<64x1xf32>
    %123 = arith.divf %121, %122 : vector<64x1xf32>
    %cst_43 = arith.constant 9.99999974E-6 : f32
    %124 = vector.broadcast %cst_43 : f32 to vector<64x1xf32>
    %125 = arith.addf %123, %124 : vector<64x1xf32>
    %126 = math.rsqrt %125 : vector<64x1xf32>
    %127 = vector.broadcast %126 : vector<64x1xf32> to vector<64x32xf32>
    %128 = arith.mulf %118, %127 : vector<64x32xf32>
    %129 = vector.broadcast %20 : vector<1x32xf32> to vector<64x32xf32>
    %130 = arith.mulf %128, %129 : vector<64x32xf32>
    %131 = vector.broadcast %21 : vector<1x32xf32> to vector<64x32xf32>
    %132 = arith.addf %130, %131 : vector<64x32xf32>
    %133 = arith.truncf %132 : vector<64x32xf32> to vector<64x32xbf16>
    %c0_44 = arith.constant 0 : index
    %c0_45 = arith.constant 0 : index
    %134 = vector.load %arg7[%c0_44, %c0_45] : memref<32x128xbf16, #tpu.memory_space<vmem>>, vector<32x128xbf16>
    %cst_46 = arith.constant dense<0.000000e+00> : vector<64x128xf32>
    %135 = tpu.matmul %133, %134, %cst_46 {dimension_numbers = #tpu.dot_dimension_numbers<[1], [0], [0], [1], [0, 0, 1, 1], [], []>} : vector<64x32xbf16>, vector<32x128xbf16>, vector<64x128xf32> -> vector<64x128xf32>
    %c0_47 = arith.constant 0 : index
    %c0_48 = arith.constant 0 : index
    %136 = vector.load %arg8[%c0_47, %c0_48] : memref<1x128xf32, #tpu.memory_space<vmem>>, vector<1x128xf32>
    %137 = vector.broadcast %136 : vector<1x128xf32> to vector<64x128xf32>
    %138 = arith.addf %135, %137 : vector<64x128xf32>
    %cst_49 = arith.constant 5.000000e-01 : f32
    %139 = vector.broadcast %cst_49 : f32 to vector<64x128xf32>
    %140 = arith.mulf %139, %138 : vector<64x128xf32>
    %cst_50 = arith.constant 4.471500e-02 : f32
    %141 = vector.broadcast %cst_50 : f32 to vector<64x128xf32>
    %142 = arith.mulf %141, %138 : vector<64x128xf32>
    %143 = arith.mulf %142, %138 : vector<64x128xf32>
    %144 = arith.mulf %143, %138 : vector<64x128xf32>
    %145 = arith.addf %138, %144 : vector<64x128xf32>
    %cst_51 = arith.constant 0.797884583 : f32
    %146 = vector.broadcast %cst_51 : f32 to vector<64x128xf32>
    %147 = arith.mulf %146, %145 : vector<64x128xf32>
    %148 = math.tanh %147 : vector<64x128xf32>
    %cst_52 = arith.constant 1.000000e+00 : f32
    %149 = vector.broadcast %cst_52 : f32 to vector<64x128xf32>
    %150 = arith.addf %149, %148 : vector<64x128xf32>
    %151 = arith.mulf %140, %150 : vector<64x128xf32>
    %152 = arith.truncf %151 : vector<64x128xf32> to vector<64x128xbf16>
    %c0_53 = arith.constant 0 : index
    %c0_54 = arith.constant 0 : index
    %153 = vector.load %arg9[%c0_53, %c0_54] : memref<128x32xbf16, #tpu.memory_space<vmem>>, vector<128x32xbf16>
    %cst_55 = arith.constant dense<0.000000e+00> : vector<64x32xf32>
    %154 = tpu.matmul %152, %153, %cst_55 {dimension_numbers = #tpu.dot_dimension_numbers<[1], [0], [0], [1], [0, 0, 1, 1], [], []>} : vector<64x128xbf16>, vector<128x32xbf16>, vector<64x32xf32> -> vector<64x32xf32>
    %155 = vector.broadcast %24 : vector<1x32xf32> to vector<64x32xf32>
    %156 = arith.addf %154, %155 : vector<64x32xf32>
    %157 = arith.addf %132, %156 : vector<64x32xf32>
    %cst_56 = arith.constant dense<0.000000e+00> : vector<64xf32>
    %158 = vector.multi_reduction <add>, %157, %cst_56 [1] : vector<64x32xf32> to vector<64xf32>
    %159 = vector.shape_cast %158 : vector<64xf32> to vector<64x1xf32>
    %cst_57 = arith.constant 3.200000e+01 : f32
    %160 = vector.broadcast %cst_57 : f32 to vector<64x1xf32>
    %161 = arith.divf %159, %160 : vector<64x1xf32>
    %162 = vector.broadcast %161 : vector<64x1xf32> to vector<64x32xf32>
    %163 = arith.subf %157, %162 : vector<64x32xf32>
    %164 = arith.mulf %163, %163 : vector<64x32xf32>
    %cst_58 = arith.constant dense<0.000000e+00> : vector<64xf32>
    %165 = vector.multi_reduction <add>, %164, %cst_58 [1] : vector<64x32xf32> to vector<64xf32>
    %166 = vector.shape_cast %165 : vector<64xf32> to vector<64x1xf32>
    %cst_59 = arith.constant 3.200000e+01 : f32
    %167 = vector.broadcast %cst_59 : f32 to vector<64x1xf32>
    %168 = arith.divf %166, %167 : vector<64x1xf32>
    %cst_60 = arith.constant 9.99999974E-6 : f32
    %169 = vector.broadcast %cst_60 : f32 to vector<64x1xf32>
    %170 = arith.addf %168, %169 : vector<64x1xf32>
    %171 = math.rsqrt %170 : vector<64x1xf32>
    %172 = vector.broadcast %171 : vector<64x1xf32> to vector<64x32xf32>
    %173 = arith.mulf %163, %172 : vector<64x32xf32>
    %174 = vector.broadcast %22 : vector<1x32xf32> to vector<64x32xf32>
    %175 = arith.mulf %173, %174 : vector<64x32xf32>
    %176 = vector.broadcast %23 : vector<1x32xf32> to vector<64x32xf32>
    %177 = arith.addf %175, %176 : vector<64x32xf32>
    %178 = vector.shape_cast %177 : vector<64x32xf32> to vector<1x64x32xf32>
    %179 = tpu.transpose %178, [0, 2, 1] : vector<1x64x32xf32> -> vector<1x32x64xf32>
    %c0_61 = arith.constant 0 : index
    %c0_62 = arith.constant 0 : index
    %c0_63 = arith.constant 0 : index
    %180 = vector.load %arg10[%c0_61, %c0_62, %c0_63] : memref<1x32x64xf32, #tpu.memory_space<vmem>>, vector<1x32x64xf32>
    tpu.vector_store %arg10[%c0_61, %c0_62, %c0_63], %179 {strides = array<i32>} : memref<1x32x64xf32, #tpu.memory_space<vmem>>, vector<1x32x64xf32>,
    return
  }
  func.func @transform_0(%arg0: i32) -> (i32, i32, i32) {
    %c0_i32 = arith.constant 0 : i32
    %c0_i32_0 = arith.constant 0 : i32
    %c0_i32_1 = arith.constant 0 : i32
    return %arg0, %c0_i32, %c0_i32_0 : i32, i32, i32
  }
  func.func @transform_1(%arg0: i32) -> (i32, i32, i32) {
    %c0_i32 = arith.constant 0 : i32
    %c0_i32_0 = arith.constant 0 : i32
    %c0_i32_1 = arith.constant 0 : i32
    return %arg0, %c0_i32, %c0_i32_0 : i32, i32, i32
  }
  func.func @transform_2(%arg0: i32) -> (i32, i32, i32) {
    %c0_i32 = arith.constant 0 : i32
    %c0_i32_0 = arith.constant 0 : i32
    %c0_i32_1 = arith.constant 0 : i32
    return %arg0, %c0_i32, %c0_i32_0 : i32, i32, i32
  }
  func.func @transform_3(%arg0: i32) -> (i32, i32, i32) {
    %c0_i32 = arith.constant 0 : i32
    %c0_i32_0 = arith.constant 0 : i32
    %c0_i32_1 = arith.constant 0 : i32
    %c0_i32_2 = arith.constant 0 : i32
    return %c0_i32, %c0_i32_0, %c0_i32_1 : i32, i32, i32
  }
  func.func @transform_4(%arg0: i32) -> (i32, i32) {
    %c0_i32 = arith.constant 0 : i32
    %c0_i32_0 = arith.constant 0 : i32
    %c0_i32_1 = arith.constant 0 : i32
    return %c0_i32, %c0_i32_0 : i32, i32
  }
  func.func @transform_5(%arg0: i32) -> (i32, i32) {
    %c0_i32 = arith.constant 0 : i32
    %c0_i32_0 = arith.constant 0 : i32
    %c0_i32_1 = arith.constant 0 : i32
    return %c0_i32, %c0_i32_0 : i32, i32
  }
  func.func @transform_6(%arg0: i32) -> (i32, i32) {
    %c0_i32 = arith.constant 0 : i32
    %c0_i32_0 = arith.constant 0 : i32
    %c0_i32_1 = arith.constant 0 : i32
    return %c0_i32, %c0_i32_0 : i32, i32
  }
  func.func @transform_7(%arg0: i32) -> (i32, i32) {
    %c0_i32 = arith.constant 0 : i32
    %c0_i32_0 = arith.constant 0 : i32
    %c0_i32_1 = arith.constant 0 : i32
    return %c0_i32, %c0_i32_0 : i32, i32
  }
  func.func @transform_8(%arg0: i32) -> (i32, i32) {
    %c0_i32 = arith.constant 0 : i32
    %c0_i32_0 = arith.constant 0 : i32
    %c0_i32_1 = arith.constant 0 : i32
    return %c0_i32, %c0_i32_0 : i32, i32
  }
  func.func @transform_9(%arg0: i32) -> (i32, i32, i32) {
    %c0_i32 = arith.constant 0 : i32
    %c0_i32_0 = arith.constant 0 : i32
    %c0_i32_1 = arith.constant 0 : i32
    return %arg0, %c0_i32, %c0_i32_0 : i32, i32, i32
  }
}

</mosaic_0001>

<llo_original>
// kernel: tpu_custom_call.1
$region0: #{tpu_custom_call.1}
  #allocation0 [shape = 'u32[]', space=smem, size = 0x4, offset = 0x4, fixed_abs, tag = 'smem constant byte address 0x4 - core index']
  #allocation1 [shape = 'u32[72,128]{1,0:T(1,128)}', space=vmem, size = 0x9000, scoped, tag = 'internal scratch']
  %s0 = inlined_call_operand.vmem [shape: f32[2,32,64], index: 0, kind: input, shape index: {}]
  %s1 = inlined_call_operand.hbm [shape: f32[2,32,64], index: 1, kind: input, shape index: {}]
  %s2 = inlined_call_operand.hbm [shape: f32[2,32,64], index: 2, kind: input, shape index: {}]
  %s3 = inlined_call_operand.hbm [shape: bf16[3,32,32], index: 3, kind: input, shape index: {}]
  %s4 = inlined_call_operand.vmem [shape: bf16[32,32], index: 4, kind: input, shape index: {}]
  %s5 = inlined_call_operand.hbm [shape: f32[9,32], index: 5, kind: input, shape index: {}]
  %s6 = inlined_call_operand.hbm [shape: bf16[32,128], index: 6, kind: input, shape index: {}]
  %s7 = inlined_call_operand.vmem [shape: f32[1,128], index: 7, kind: input, shape index: {}]
  %s8 = inlined_call_operand.vmem [shape: bf16[128,32], index: 8, kind: input, shape index: {}]
  %s9 = inlined_call_operand.hbm [shape: f32[2,32,64], index: 9, kind: output, shape index: {}]
  %s10 = sld [smem:[#allocation0]]
  $region89: #{tpu_custom_call.1} parent=0
    _
  %s12 = ssub.s32 1, %s10
  %s13 = scalar_select 0, %s12, %s10
  $region1: #{tpu_custom_call.1} parent=0
    #allocation2 [shape = 'u8[32768]{0}', space=vmem, size = 0x8000, scoped, tag = 'input window, operand 1']
    #allocation3 [shape = 's32[2]{0}', space=sflag, size = 0x8, scoped, tag = 'scoped memory for tpu_custom_call.1']
    #allocation4 [shape = 's32[2]{0}', space=sflag, size = 0x8, scoped, tag = 'scoped memory for tpu_custom_call.1']
    #allocation5 [shape = 'u8[32768]{0}', space=vmem, size = 0x8000, scoped, tag = 'input window, operand 2']
    #allocation6 [shape = 's32[2]{0}', space=sflag, size = 0x8, scoped, tag = 'scoped memory for tpu_custom_call.1']
    #allocation7 [shape = 'u8[24576]{0}', space=vmem, size = 0x6000, scoped, tag = 'input window, operand 3, single buffered']
    #allocation8 [shape = 'u8[8192]{0}', space=vmem, size = 0x2000, scoped, tag = 'input window, operand 5, single buffered']
    #allocation9 [shape = 's32[1]{0}', space=sflag, size = 0x4, scoped, tag = 'scoped memory for tpu_custom_call.1']
    #allocation10 [shape = 'u8[8192]{0}', space=vmem, size = 0x2000, scoped, tag = 'input window, operand 6, single buffered']
    #allocation11 [shape = 'u8[32768]{0}', space=vmem, size = 0x8000, scoped, tag = 'output window, operand 0']
    %14 = vsyncpa [#allocation3], 0
    %s15 = scalar_lea.sflag [#allocation3], 1
    %16 = vsyncpa %s15, 0
    %17 = vsyncpa [#allocation6], 0
    %s18 = scalar_lea.sflag [#allocation6], 1
    %19 = vsyncpa %s18, 0
    %20 = vsyncpa [#allocation9], 0
    %21 = vsyncpa [#allocation4], 0
    %s22 = scalar_lea.sflag [#allocation4], 1
    %23 = vsyncpa %s22, 0
    loop: start=0, step=1, limit=4
    $region2: #{tpu_custom_call.1} parent=1 // loop_pre_header
      _
    $region3: #{tpu_custom_call.1} parent=1 // loop_header
      %s25 = sphi 0, %s29
      %p26 = scmp.ge.s32.totalorder %s25, 4
      %s35 = sphi 0, %s37
      %s38 = sphi 0, %s35
      %s39 = sphi 0, %s38
      %s55 = sphi 0, %s39
      %s61 = sphi 0, %s63
      %s64 = sphi 0, %s61
      %s65 = sphi 0, %s64
      %s81 = sphi 0, %s65
      %s87 = sphi 0, %s89
      %s90 = sphi 0, %s87
      %s91 = sphi 0, %s90
      %s107 = sphi 0, %s91
      %s111 = sphi 0, %s111
      %s113 = sphi 0, %s111
      %s114 = sphi 0, %s113
      %s128 = sphi 0, %s114
      %s132 = sphi 0, %s132
      %s134 = sphi 0, %s132
      %s135 = sphi 0, %s134
      %s149 = sphi 0, %s135
      %s153 = sphi 0, %s153
      %s155 = sphi 0, %s153
      %s156 = sphi 0, %s155
      %s170 = sphi 0, %s156
      %s174 = sphi 0, %s174
      %s176 = sphi 0, %s174
      %s177 = sphi 0, %s176
      %s191 = sphi 0, %s177
      %s195 = sphi 0, %s195
      %s197 = sphi 0, %s195
      %s198 = sphi 0, %s197
      %s212 = sphi 0, %s198
      %s216 = sphi 0, %s216
      %s218 = sphi 0, %s216
      %s219 = sphi 0, %s218
      %s233 = sphi 0, %s219
      %s239 = sphi 0, %s241
      %s242 = sphi 0, %s239
      %s243 = sphi 0, %s242
      %s259 = sphi 0, %s243
    $region4: #{tpu_custom_call.1} parent=1 // loop_header_branch
      %28 = sbr.rel (%p26) target = $region8
    $region5: #{tpu_custom_call.1} parent=1 // loop_body
      %s30 = ssub.s32 %s25, 1
      %s31 = ssub.s32 %s25, 2
      %s32 = sadd.s32 %s25, 1
      %s33 = ssub.s32 %s25, %s32
      %p34 = scmp.eq.s32.totalorder %s33, 0
      %s36 = sadd.s32 %s35, 1
      %s37 = scalar_select %p34, %s35, %s36
      %p40 = pneg %p34
      %p41 = scmp.eq.s32.totalorder %s25, 1
      %p42 = por %p40, %p41
      %p43 = scmp.ne.s32.totalorder %s35, %s38
      %p44 = scmp.eq.s32.totalorder %s25, 0
      %p45 = por %p43, %p44
      %p46 = scmp.ne.s32.totalorder %s35, %s38
      %p47 = scmp.eq.s32.totalorder %s30, 1
      %p48 = por %p46, %p47
      %p49 = scmp.ne.s32.totalorder %s38, %s39
      %p50 = scmp.eq.s32.totalorder %s30, 0
      %p51 = por %p49, %p50
      %p52 = scmp.ne.s32.totalorder %s38, %s39
      %p53 = scmp.eq.s32.totalorder %s31, 1
      %p54 = por %p52, %p53
      %p56 = scmp.ne.s32.totalorder %s39, %s55
      %p57 = scmp.eq.s32.totalorder %s31, 0
      %p58 = por %p56, %p57
      %s59 = ssub.s32 %s25, %s32
      %p60 = scmp.eq.s32.totalorder %s59, 0
      %s62 = sadd.s32 %s61, 1
      %s63 = scalar_select %p60, %s61, %s62
      %p66 = pneg %p60
      %p67 = scmp.eq.s32.totalorder %s25, 1
      %p68 = por %p66, %p67
      %p69 = scmp.ne.s32.totalorder %s61, %s64
      %p70 = scmp.eq.s32.totalorder %s25, 0
      %p71 = por %p69, %p70
      %p72 = scmp.ne.s32.totalorder %s61, %s64
      %p73 = scmp.eq.s32.totalorder %s30, 1
      %p74 = por %p72, %p73
      %p75 = scmp.ne.s32.totalorder %s64, %s65
      %p76 = scmp.eq.s32.totalorder %s30, 0
      %p77 = por %p75, %p76
      %p78 = scmp.ne.s32.totalorder %s64, %s65
      %p79 = scmp.eq.s32.totalorder %s31, 1
      %p80 = por %p78, %p79
      %p82 = scmp.ne.s32.totalorder %s65, %s81
      %p83 = scmp.eq.s32.totalorder %s31, 0
      %p84 = por %p82, %p83
      %s85 = ssub.s32 %s25, %s32
      %p86 = scmp.eq.s32.totalorder %s85, 0
      %s88 = sadd.s32 %s87, 1
      %s89 = scalar_select %p86, %s87, %s88
      %p92 = pneg %p86
      %p93 = scmp.eq.s32.totalorder %s25, 1
      %p94 = por %p92, %p93
      %p95 = scmp.ne.s32.totalorder %s87, %s90
      %p96 = scmp.eq.s32.totalorder %s25, 0
      %p97 = por %p95, %p96
      %p98 = scmp.ne.s32.totalorder %s87, %s90
      %p99 = scmp.eq.s32.totalorder %s30, 1
      %p100 = por %p98, %p99
      %p101 = scmp.ne.s32.totalorder %s90, %s91
      %p102 = scmp.eq.s32.totalorder %s30, 0
      %p103 = por %p101, %p102
      %p104 = scmp.ne.s32.totalorder %s90, %s91
      %p105 = scmp.eq.s32.totalorder %s31, 1
      %p106 = por %p104, %p105
      %p108 = scmp.ne.s32.totalorder %s91, %s107
      %p109 = scmp.eq.s32.totalorder %s31, 0
      %p110 = por %p108, %p109
      %s112 = sadd.s32 %s111, 1
      %p115 = scmp.eq.s32.totalorder %s25, 1
      %p116 = scmp.ne.s32.totalorder %s111, %s113
      %p117 = scmp.eq.s32.totalorder %s25, 0
      %p118 = por %p116, %p117
      %p119 = scmp.ne.s32.totalorder %s111, %s113
      %p120 = scmp.eq.s32.totalorder %s30, 1
      %p121 = por %p119, %p120
      %p122 = scmp.ne.s32.totalorder %s113, %s114
      %p123 = scmp.eq.s32.totalorder %s30, 0
      %p124 = por %p122, %p123
      %p125 = scmp.ne.s32.totalorder %s113, %s114
      %p126 = scmp.eq.s32.totalorder %s31, 1
      %p127 = por %p125, %p126
      %p129 = scmp.ne.s32.totalorder %s114, %s128
      %p130 = scmp.eq.s32.totalorder %s31, 0
      %p131 = por %p129, %p130
      %s133 = sadd.s32 %s132, 1
      %p136 = scmp.eq.s32.totalorder %s25, 1
      %p137 = scmp.ne.s32.totalorder %s132, %s134
      %p138 = scmp.eq.s32.totalorder %s25, 0
      %p139 = por %p137, %p138
      %p140 = scmp.ne.s32.totalorder %s132, %s134
      %p141 = scmp.eq.s32.totalorder %s30, 1
      %p142 = por %p140, %p141
      %p143 = scmp.ne.s32.totalorder %s134, %s135
      %p144 = scmp.eq.s32.totalorder %s30, 0
      %p145 = por %p143, %p144
      %p146 = scmp.ne.s32.totalorder %s134, %s135
      %p147 = scmp.eq.s32.totalorder %s31, 1
      %p148 = por %p146, %p147
      %p150 = scmp.ne.s32.totalorder %s135, %s149
      %p151 = scmp.eq.s32.totalorder %s31, 0
      %p152 = por %p150, %p151
      %s154 = sadd.s32 %s153, 1
      %p157 = scmp.eq.s32.totalorder %s25, 1
      %p158 = scmp.ne.s32.totalorder %s153, %s155
      %p159 = scmp.eq.s32.totalorder %s25, 0
      %p160 = por %p158, %p159
      %p161 = scmp.ne.s32.totalorder %s153, %s155
      %p162 = scmp.eq.s32.totalorder %s30, 1
      %p163 = por %p161, %p162
      %p164 = scmp.ne.s32.totalorder %s155, %s156
      %p165 = scmp.eq.s32.totalorder %s30, 0
      %p166 = por %p164, %p165
      %p167 = scmp.ne.s32.totalorder %s155, %s156
      %p168 = scmp.eq.s32.totalorder %s31, 1
      %p169 = por %p167, %p168
      %p171 = scmp.ne.s32.totalorder %s156, %s170
      %p172 = scmp.eq.s32.totalorder %s31, 0
      %p173 = por %p171, %p172
      %s175 = sadd.s32 %s174, 1
      %p178 = scmp.eq.s32.totalorder %s25, 1
      %p179 = scmp.ne.s32.totalorder %s174, %s176
      %p180 = scmp.eq.s32.totalorder %s25, 0
      %p181 = por %p179, %p180
      %p182 = scmp.ne.s32.totalorder %s174, %s176
      %p183 = scmp.eq.s32.totalorder %s30, 1
      %p184 = por %p182, %p183
      %p185 = scmp.ne.s32.totalorder %s176, %s177
      %p186 = scmp.eq.s32.totalorder %s30, 0
      %p187 = por %p185, %p186
      %p188 = scmp.ne.s32.totalorder %s176, %s177
      %p189 = scmp.eq.s32.totalorder %s31, 1
      %p190 = por %p188, %p189
      %p192 = scmp.ne.s32.totalorder %s177, %s191
      %p193 = scmp.eq.s32.totalorder %s31, 0
      %p194 = por %p192, %p193
      %s196 = sadd.s32 %s195, 1
      %p199 = scmp.eq.s32.totalorder %s25, 1
      %p200 = scmp.ne.s32.totalorder %s195, %s197
      %p201 = scmp.eq.s32.totalorder %s25, 0
      %p202 = por %p200, %p201
      %p203 = scmp.ne.s32.totalorder %s195, %s197
      %p204 = scmp.eq.s32.totalorder %s30, 1
      %p205 = por %p203, %p204
      %p206 = scmp.ne.s32.totalorder %s197, %s198
      %p207 = scmp.eq.s32.totalorder %s30, 0
      %p208 = por %p206, %p207
      %p209 = scmp.ne.s32.totalorder %s197, %s198
      %p210 = scmp.eq.s32.totalorder %s31, 1
      %p211 = por %p209, %p210
      %p213 = scmp.ne.s32.totalorder %s198, %s212
      %p214 = scmp.eq.s32.totalorder %s31, 0
      %p215 = por %p213, %p214
      %s217 = sadd.s32 %s216, 1
      %p220 = scmp.eq.s32.totalorder %s25, 1
      %p221 = scmp.ne.s32.totalorder %s216, %s218
      %p222 = scmp.eq.s32.totalorder %s25, 0
      %p223 = por %p221, %p222
      %p224 = scmp.ne.s32.totalorder %s216, %s218
      %p225 = scmp.eq.s32.totalorder %s30, 1
      %p226 = por %p224, %p225
      %p227 = scmp.ne.s32.totalorder %s218, %s219
      %p228 = scmp.eq.s32.totalorder %s30, 0
      %p229 = por %p227, %p228
      %p230 = scmp.ne.s32.totalorder %s218, %s219
      %p231 = scmp.eq.s32.totalorder %s31, 1
      %p232 = por %p230, %p231
      %p234 = scmp.ne.s32.totalorder %s219, %s233
      %p235 = scmp.eq.s32.totalorder %s31, 0
      %p236 = por %p234, %p235
      %s237 = ssub.s32 %s25, %s32
      %p238 = scmp.eq.s32.totalorder %s237, 0
      %s240 = sadd.s32 %s239, 1
      %s241 = scalar_select %p238, %s239, %s240
      %p244 = pneg %p238
      %p245 = scmp.eq.s32.totalorder %s25, 1
      %p246 = por %p244, %p245
      %p247 = scmp.ne.s32.totalorder %s239, %s242
      %p248 = scmp.eq.s32.totalorder %s25, 0
      %p249 = por %p247, %p248
      %p250 = scmp.ne.s32.totalorder %s239, %s242
      %p251 = scmp.eq.s32.totalorder %s30, 1
      %p252 = por %p250, %p251
      %p253 = scmp.ne.s32.totalorder %s242, %s243
      %p254 = scmp.eq.s32.totalorder %s30, 0
      %p255 = por %p253, %p254
      %p256 = scmp.ne.s32.totalorder %s242, %s243
      %p257 = scmp.eq.s32.totalorder %s31, 1
      %p258 = por %p256, %p257
      %p260 = scmp.ne.s32.totalorder %s243, %s259
      %p261 = scmp.eq.s32.totalorder %s31, 0
      %p262 = por %p260, %p261
      %p263 = scmp.le.s32.totalorder 1, %s25
      %p264 = scmp.lt.s32.totalorder %s25, 3
      %p265 = pnand %p263, %p264
      %p266 = pneg %p265
      // Predicated region
      $region9: #{tpu_custom_call.1} parent=5 // pred_check
        _
      $region10: #{tpu_custom_call.1} parent=5 // pred_check_branch
        %268 = sbr.rel (%p265) target = $region12
      $region11: #{tpu_custom_call.1} parent=5 // pred_region
        %s269 = ssub.s32 %s25, 1
        // Predicated region
        $region13: #{tpu_custom_call.1} parent=11 // pred_check
          %p270 = pneg %p124
        $region14: #{tpu_custom_call.1} parent=11 // pred_check_branch
          %272 = sbr.rel (%p270) target = $region16
        $region15: #{tpu_custom_call.1} parent=11 // pred_region
          %274 = vsyncadd [#allocation6], 0
          %s275 = sshll.u32 %s3, 4
          %s276 = int_to_ptr.hbm [resolvable:$true] %s275
          %s277 = sshll.u32 [#allocation7], 4
          %s278 = int_to_ptr.vmem [resolvable:$true] %s277
          %283 = dma.hbm_to_vmem [thread:$0]  %s276, 768, %s278, [#allocation6], 64, 64, 4
        $region16: #{tpu_custom_call.1} parent=11 // pred_fallthru
          _
        // Predicated region
        $region17: #{tpu_custom_call.1} parent=11 // pred_check
          %p284 = pneg %p145
        $region18: #{tpu_custom_call.1} parent=11 // pred_check_branch
          %286 = sbr.rel (%p284) target = $region20
        $region19: #{tpu_custom_call.1} parent=11 // pred_region
          _
        $region20: #{tpu_custom_call.1} parent=11 // pred_fallthru
          _
        // Predicated region
        $region21: #{tpu_custom_call.1} parent=11 // pred_check
          %p287 = pneg %p166
        $region22: #{tpu_custom_call.1} parent=11 // pred_check_branch
          %289 = sbr.rel (%p287) target = $region24
        $region23: #{tpu_custom_call.1} parent=11 // pred_region
          %291 = vsyncadd [#allocation9], 0
          %s292 = sshll.u32 %s5, 4
          %s293 = int_to_ptr.hbm [resolvable:$true] %s292
          %s294 = sshll.u32 [#allocation8], 4
          %s295 = int_to_ptr.vmem [resolvable:$true] %s294
          %300 = dma.hbm_to_vmem [thread:$0]  %s293, 256, %s295, [#allocation9], 128, 128, 8
        $region24: #{tpu_custom_call.1} parent=11 // pred_fallthru
          _
        // Predicated region
        $region25: #{tpu_custom_call.1} parent=11 // pred_check
          %p301 = pneg %p187
        $region26: #{tpu_custom_call.1} parent=11 // pred_check_branch
          %303 = sbr.rel (%p301) target = $region28
        $region27: #{tpu_custom_call.1} parent=11 // pred_region
          %305 = vsyncadd [#allocation9], 0
          %s306 = sshll.u32 %s6, 4
          %s307 = int_to_ptr.hbm [resolvable:$true] %s306
          %s308 = sshll.u32 [#allocation10], 4
          %s309 = int_to_ptr.vmem [resolvable:$true] %s308
          %314 = dma.hbm_to_vmem [thread:$0]  %s307, 256, %s309, [#allocation9], 64, 64, 4
        $region28: #{tpu_custom_call.1} parent=11 // pred_fallthru
          _
        // Predicated region
        $region29: #{tpu_custom_call.1} parent=11 // pred_check
          %p315 = pneg %p208
        $region30: #{tpu_custom_call.1} parent=11 // pred_check_branch
          %317 = sbr.rel (%p315) target = $region32
        $region31: #{tpu_custom_call.1} parent=11 // pred_region
          _
        $region32: #{tpu_custom_call.1} parent=11 // pred_fallthru
          _
        // Predicated region
        $region33: #{tpu_custom_call.1} parent=11 // pred_check
          %p318 = pneg %p229
        $region34: #{tpu_custom_call.1} parent=11 // pred_check_branch
          %320 = sbr.rel (%p318) target = $region36
        $region35: #{tpu_custom_call.1} parent=11 // pred_region
          _
        $region36: #{tpu_custom_call.1} parent=11 // pred_fallthru
          _
      $region12: #{tpu_custom_call.1} parent=5 // pred_fallthru
        _
      %p321 = scmp.lt.s32.totalorder %s25, 2
      // Predicated region
      $region37: #{tpu_custom_call.1} parent=5 // pred_check
        %p322 = pneg %p321
      $region38: #{tpu_custom_call.1} parent=5 // pred_check_branch
        %324 = sbr.rel (%p322) target = $region40
      $region39: #{tpu_custom_call.1} parent=5 // pred_region
        // Predicated region
        $region41: #{tpu_custom_call.1} parent=39 // pred_check
          %p325 = pneg %p45
        $region42: #{tpu_custom_call.1} parent=39 // pred_check_branch
          %327 = sbr.rel (%p325) target = $region44
        $region43: #{tpu_custom_call.1} parent=39 // pred_region
          %p328 = scmp.lt.s32.totalorder %s25, 1
          %s329 = scalar_select %p328, %s25, 1
          %s330 = smul.addr %s329, 4
          %s331 = smul.addr %s330, 8
          %s332 = scalar_lea.vmem %s0, %s331
        $region44: #{tpu_custom_call.1} parent=39 // pred_fallthru
          _
        // Predicated region
        $region45: #{tpu_custom_call.1} parent=39 // pred_check
          %p333 = pneg %p71
        $region46: #{tpu_custom_call.1} parent=39 // pred_check_branch
          %335 = sbr.rel (%p333) target = $region48
        $region47: #{tpu_custom_call.1} parent=39 // pred_region
          %s336 = sand.u32 %s61, 1
          %s337 = scalar_lea.sflag [#allocation3], %s336
          %s338 = sand.u32 %s61, 1
          %s339 = smul.addr %s338, 32
          %s340 = scalar_lea.vmem [#allocation2], %s339
          %342 = vsyncadd %s337, 0
          %s343 = smul.addr %s25, 4
          %s344 = smul.addr %s343, 8
          %s345 = scalar_lea.hbm %s1, %s344
          %s346 = sshll.u32 %s345, 4
          %s347 = int_to_ptr.hbm [resolvable:$true] %s346
          %s348 = sshll.u32 %s340, 4
          %s349 = int_to_ptr.vmem [resolvable:$true] %s348
          %354 = dma.hbm_to_vmem [thread:$0]  %s347, 512, %s349, %s337, 128, 128, 8
        $region48: #{tpu_custom_call.1} parent=39 // pred_fallthru
          _
        // Predicated region
        $region49: #{tpu_custom_call.1} parent=39 // pred_check
          %p355 = pneg %p97
        $region50: #{tpu_custom_call.1} parent=39 // pred_check_branch
          %357 = sbr.rel (%p355) target = $region52
        $region51: #{tpu_custom_call.1} parent=39 // pred_region
          %s358 = sand.u32 %s25, 1
          %s359 = scalar_lea.sflag [#allocation6], %s358
          %s360 = sand.u32 %s87, 1
          %s361 = smul.addr %s360, 32
          %s362 = scalar_lea.vmem [#allocation5], %s361
          %364 = vsyncadd %s359, 0
          %s365 = smul.addr %s25, 4
          %s366 = smul.addr %s365, 8
          %s367 = scalar_lea.hbm %s2, %s366
          %s368 = sshll.u32 %s367, 4
          %s369 = int_to_ptr.hbm [resolvable:$true] %s368
          %s370 = sshll.u32 %s362, 4
          %s371 = int_to_ptr.vmem [resolvable:$true] %s370
          %376 = dma.hbm_to_vmem [thread:$0]  %s369, 512, %s371, %s359, 128, 128, 8
        $region52: #{tpu_custom_call.1} parent=39 // pred_fallthru
          _
      $region40: #{tpu_custom_call.1} parent=5 // pred_fallthru
        _
      %p377 = scmp.le.s32.totalorder 1, %s25
      %p378 = scmp.lt.s32.totalorder %s25, 3
      %p379 = pnand %p377, %p378
      %p380 = pneg %p379
      // Predicated region
      $region53: #{tpu_custom_call.1} parent=5 // pred_check
        _
      $region54: #{tpu_custom_call.1} parent=5 // pred_check_branch
        %382 = sbr.rel (%p379) target = $region56
      $region55: #{tpu_custom_call.1} parent=5 // pred_region
        %s383 = ssub.s32 %s25, 1
        %s384 = sand.u32 %s64, 1
        %s385 = scalar_lea.sflag [#allocation3], %s384
        %s386 = sand.u32 %s64, 1
        %s387 = smul.addr %s386, 32
        %s388 = scalar_lea.vmem [#allocation2], %s387
        // Predicated region
        $region57: #{tpu_custom_call.1} parent=55 // pred_check
          %p389 = pneg %p77
        $region58: #{tpu_custom_call.1} parent=55 // pred_check_branch
          %391 = sbr.rel (%p389) target = $region60
        $region59: #{tpu_custom_call.1} parent=55 // pred_region
          %393 = dma.done %s385, 512
        $region60: #{tpu_custom_call.1} parent=55 // pred_fallthru
          _
        %s394 = sand.u32 %s30, 1
        %s395 = scalar_lea.sflag [#allocation6], %s394
        %s396 = sand.u32 %s90, 1
        %s397 = smul.addr %s396, 32
        %s398 = scalar_lea.vmem [#allocation5], %s397
        // Predicated region
        $region61: #{tpu_custom_call.1} parent=55 // pred_check
          %p399 = pneg %p103
        $region62: #{tpu_custom_call.1} parent=55 // pred_check_branch
          %401 = sbr.rel (%p399) target = $region64
        $region63: #{tpu_custom_call.1} parent=55 // pred_region
          %403 = dma.done %s395, 512
        $region64: #{tpu_custom_call.1} parent=55 // pred_fallthru
          _
        // Predicated region
        $region65: #{tpu_custom_call.1} parent=55 // pred_check
          %p404 = pneg %p124
        $region66: #{tpu_custom_call.1} parent=55 // pred_check_branch
          %406 = sbr.rel (%p404) target = $region68
        $region67: #{tpu_custom_call.1} parent=55 // pred_region
          %408 = dma.done [#allocation6], 768
        $region68: #{tpu_custom_call.1} parent=55 // pred_fallthru
          _
        // Predicated region
        $region69: #{tpu_custom_call.1} parent=55 // pred_check
          %p409 = pneg %p166
        $region70: #{tpu_custom_call.1} parent=55 // pred_check_branch
          %411 = sbr.rel (%p409) target = $region72
        $region71: #{tpu_custom_call.1} parent=55 // pred_region
          %413 = dma.done [#allocation9], 256
        $region72: #{tpu_custom_call.1} parent=55 // pred_fallthru
          _
        // Predicated region
        $region73: #{tpu_custom_call.1} parent=55 // pred_check
          %p414 = pneg %p187
        $region74: #{tpu_custom_call.1} parent=55 // pred_check_branch
          %416 = sbr.rel (%p414) target = $region76
        $region75: #{tpu_custom_call.1} parent=55 // pred_region
          %418 = dma.done [#allocation9], 256
        $region76: #{tpu_custom_call.1} parent=55 // pred_fallthru
          _
        %p419 = scmp.lt.s32.totalorder %s30, 1
        %s420 = scalar_select %p419, %s30, 1
        %s421 = smul.addr %s420, 4
        %s422 = smul.addr %s421, 8
        %s423 = scalar_lea.vmem %s0, %s422
        %p424 = pneg %p51
        %p425 = pneg %p48
        %s426 = sand.u32 %s64, 1
        %s427 = scalar_lea.sflag [#allocation3], %s426
        %s428 = sand.u32 %s64, 1
        %s429 = smul.addr %s428, 32
        %s430 = scalar_lea.vmem [#allocation2], %s429
        %p431 = pneg %p77
        %p432 = pneg %p74
        %s433 = sand.u32 %s30, 1
        %s434 = scalar_lea.sflag [#allocation6], %s433
        %s435 = sand.u32 %s90, 1
        %s436 = smul.addr %s435, 32
        %s437 = scalar_lea.vmem [#allocation5], %s436
        %p438 = pneg %p103
        %p439 = pneg %p100
        %p440 = pneg %p124
        %p441 = pneg %p121
        %p442 = pneg %p145
        %p443 = pneg %p142
        %p444 = pneg %p166
        %p445 = pneg %p163
        %p446 = pneg %p187
        %p447 = pneg %p184
        %p448 = pneg %p208
        %p449 = pneg %p205
        %p450 = pneg %p229
        %p451 = pneg %p226
        %p452 = pneg %p255
        %p453 = pneg %p252
        %s454 = sand.u32 %s242, 1
        %s455 = scalar_lea.sflag [#allocation4], %s454
        %s456 = sand.u32 %s242, 1
        %s457 = smul.addr %s456, 32
        %s458 = scalar_lea.vmem [#allocation11], %s457
        %p459 = scmp.lt.s32.totalorder %s30, 1
        %s460 = scalar_select %p459, %s30, 1
        %s461 = smul.addr %s460, 4
        %s462 = smul.addr %s461, 8
        %s463 = scalar_lea.vmem %s0, %s462
        %v465 = vld [vmem:[%s463] sm:$0xff]
        %v466 = vld [vmem:[%s463 + $0x8] sm:$0xff]
        %v467 = vld [vmem:[%s463 + $0x10] sm:$0xff]
        %v468 = vld [vmem:[%s463 + $0x18] sm:$0xff]
        %469 = vxpose.xlu0.b32.start [1/16] %v465, 128
        %470 = vxpose.xlu0.b32.cont [2/16] %v466, 128
        %471 = vxpose.xlu0.b32.cont [3/16] %v467, 128
        %472 = vxpose.xlu0.b32.cont [4/16] %v468, 128
        %473 = vxpose.xlu0.b32.cont [5/16] 0.0, 128
        %474 = vxpose.xlu0.b32.cont [6/16] 0.0, 128
        %475 = vxpose.xlu0.b32.cont [7/16] 0.0, 128
        %476 = vxpose.xlu0.b32.cont [8/16] 0.0, 128
        %477 = vxpose.xlu0.b32.cont [9/16] 0.0, 128
        %478 = vxpose.xlu0.b32.cont [10/16] 0.0, 128
        %479 = vxpose.xlu0.b32.cont [11/16] 0.0, 128
        %480 = vxpose.xlu0.b32.cont [12/16] 0.0, 128
        %481 = vxpose.xlu0.b32.cont [13/16] 0.0, 128
        %482 = vxpose.xlu0.b32.cont [14/16] 0.0, 128
        %483 = vxpose.xlu0.b32.cont [15/16] 0.0, 128
        %484 = vxpose.xlu0.b32.end [16/16] 0.0, 128
        %v485 = vpop.trf.xlu0
        %v486 = vpop.trf.xlu0
        %v487 = vpop.trf.xlu0
        %v488 = vpop.trf.xlu0
        %v489 = vpop.trf.xlu0
        %v490 = vpop.trf.xlu0
        %v491 = vpop.trf.xlu0
        %v492 = vpop.trf.xlu0
        %v493 = vpop.trf.xlu0
        %v494 = vpop.trf.xlu0
        %v495 = vpop.trf.xlu0
        %v496 = vpop.trf.xlu0
        %v497 = vpop.trf.xlu0
        %v498 = vpop.trf.xlu0
        %v499 = vpop.trf.xlu0
        %v500 = vpop.trf.xlu0
        %v501 = vld [vmem:[%s388] sm:$0xff]
        %v502 = vld [vmem:[%s388 + $0x8] sm:$0xff]
        %v503 = vld [vmem:[%s388 + $0x10] sm:$0xff]
        %v504 = vld [vmem:[%s388 + $0x18] sm:$0xff]
        %505 = vxpose.xlu0.b32.start [1/16] %v501, 128
        %506 = vxpose.xlu0.b32.cont [2/16] %v502, 128
        %507 = vxpose.xlu0.b32.cont [3/16] %v503, 128
        %508 = vxpose.xlu0.b32.cont [4/16] %v504, 128
        %509 = vxpose.xlu0.b32.cont [5/16] 0.0, 128
        %510 = vxpose.xlu0.b32.cont [6/16] 0.0, 128
        %511 = vxpose.xlu0.b32.cont [7/16] 0.0, 128
        %512 = vxpose.xlu0.b32.cont [8/16] 0.0, 128
        %513 = vxpose.xlu0.b32.cont [9/16] 0.0, 128
        %514 = vxpose.xlu0.b32.cont [10/16] 0.0, 128
        %515 = vxpose.xlu0.b32.cont [11/16] 0.0, 128
        %516 = vxpose.xlu0.b32.cont [12/16] 0.0, 128
        %517 = vxpose.xlu0.b32.cont [13/16] 0.0, 128
        %518 = vxpose.xlu0.b32.cont [14/16] 0.0, 128
        %519 = vxpose.xlu0.b32.cont [15/16] 0.0, 128
        %520 = vxpose.xlu0.b32.end [16/16] 0.0, 128
        %v521 = vpop.trf.xlu0
        %v522 = vpop.trf.xlu0
        %v523 = vpop.trf.xlu0
        %v524 = vpop.trf.xlu0
        %v525 = vpop.trf.xlu0
        %v526 = vpop.trf.xlu0
        %v527 = vpop.trf.xlu0
        %v528 = vpop.trf.xlu0
        %v529 = vpop.trf.xlu0
        %v530 = vpop.trf.xlu0
        %v531 = vpop.trf.xlu0
        %v532 = vpop.trf.xlu0
        %v533 = vpop.trf.xlu0
        %v534 = vpop.trf.xlu0
        %v535 = vpop.trf.xlu0
        %v536 = vpop.trf.xlu0
        %v537 = vld [vmem:[%s398] sm:$0xff]
        %v538 = vld [vmem:[%s398 + $0x8] sm:$0xff]
        %v539 = vld [vmem:[%s398 + $0x10] sm:$0xff]
        %v540 = vld [vmem:[%s398 + $0x18] sm:$0xff]
        %541 = vxpose.xlu0.b32.start [1/16] %v537, 128
        %542 = vxpose.xlu0.b32.cont [2/16] %v538, 128
        %543 = vxpose.xlu0.b32.cont [3/16] %v539, 128
        %544 = vxpose.xlu0.b32.cont [4/16] %v540, 128
        %545 = vxpose.xlu0.b32.cont [5/16] 0.0, 128
        %546 = vxpose.xlu0.b32.cont [6/16] 0.0, 128
        %547 = vxpose.xlu0.b32.cont [7/16] 0.0, 128
        %548 = vxpose.xlu0.b32.cont [8/16] 0.0, 128
        %549 = vxpose.xlu0.b32.cont [9/16] 0.0, 128
        %550 = vxpose.xlu0.b32.cont [10/16] 0.0, 128
        %551 = vxpose.xlu0.b32.cont [11/16] 0.0, 128
        %552 = vxpose.xlu0.b32.cont [12/16] 0.0, 128
        %553 = vxpose.xlu0.b32.cont [13/16] 0.0, 128
        %554 = vxpose.xlu0.b32.cont [14/16] 0.0, 128
        %555 = vxpose.xlu0.b32.cont [15/16] 0.0, 128
        %556 = vxpose.xlu0.b32.end [16/16] 0.0, 128
        %v557 = vpop.trf.xlu0
        %v558 = vpop.trf.xlu0
        %v559 = vpop.trf.xlu0
        %v560 = vpop.trf.xlu0
        %v561 = vpop.trf.xlu0
        %v562 = vpop.trf.xlu0
        %v563 = vpop.trf.xlu0
        %v564 = vpop.trf.xlu0
        %v565 = vpop.trf.xlu0
        %v566 = vpop.trf.xlu0
        %v567 = vpop.trf.xlu0
        %v568 = vpop.trf.xlu0
        %v569 = vpop.trf.xlu0
        %v570 = vpop.trf.xlu0
        %v571 = vpop.trf.xlu0
        %v572 = vpop.trf.xlu0
        %v573 = vld [vmem:[#allocation7] sm:$0xf]
        %v574 = vld [vmem:[#allocation7 + $0x4] sm:$0xf]
        %v575 = vld [vmem:[#allocation7 + $0x8] sm:$0xf]
        %v576 = vld [vmem:[#allocation7 + $0xc] sm:$0xf]
        %s577 = scalar_lea.vmem [#allocation7], 16
        %v578 = vld [vmem:[%s577] sm:$0xf]
        %v579 = vld [vmem:[%s577 + $0x4] sm:$0xf]
        %v580 = vld [vmem:[%s577 + $0x8] sm:$0xf]
        %v581 = vld [vmem:[%s577 + $0xc] sm:$0xf]
        %s582 = scalar_lea.vmem [#allocation7], 32
        %v583 = vld [vmem:[%s582] sm:$0xf]
        %v584 = vld [vmem:[%s582 + $0x4] sm:$0xf]
        %v585 = vld [vmem:[%s582 + $0x8] sm:$0xf]
        %v586 = vld [vmem:[%s582 + $0xc] sm:$0xf]
        %v587 = vld [vmem:[#allocation8] sm:$0xff]
        %v588 = vld [vmem:[#allocation8 + $0x8] sm:$0x1]
        %v589 = vpack.c.bf16 %v486, %v485
        %v590 = vpack.c.bf16 %v488, %v487
        %v591 = vpack.c.bf16 %v490, %v489
        %v592 = vpack.c.bf16 %v492, %v491
        %v597 = vunpack.c.l.b16 %v573
        %v598 = vunpack.c.l.b16 %v574
        %v599 = vunpack.c.l.b16 %v575
        %v600 = vunpack.c.l.b16 %v576
        %v601 = vpack.c.b16 %v598, %v597
        %v602 = vpack.c.b16 %v600, %v599
        %vm605 = vcmask 261120
        %v607 = vsel %vm605, %v589, 0
        %v610 = vsel %vm605, %v590, 0
        %v613 = vsel %vm605, %v591, 0
        %v616 = vsel %vm605, %v592, 0
        %618 = vmatpush.bf16.msra.mxu0 0
        %619 = vmatpush.bf16.msra.mxu0 0
        %620 = vmatpush.bf16.msra.mxu0 0
        %621 = vmatpush.bf16.msra.mxu0 0
        %622 = vmatpush.bf16.msra.mxu0 0
        %623 = vmatpush.bf16.msra.mxu0 0
        %624 = vmatpush.bf16.msra.mxu0 %v602
        %625 = vmatpush.bf16.msra.mxu0 %v601
        %626 = vmatmul.bf16.gmra.mxu0 %v607
        %v627 = vpop.f32.mrf.mxu0
        %v628 = vadd.f32 0.0, %v627
        %v629 = vpop.f32.mrf.mxu0
        %v630 = vadd.f32 0.0, %v629
        %631 = vmatmul.bf16.gmra.mxu0 %v610
        %v632 = vpop.f32.mrf.mxu0
        %v633 = vadd.f32 0.0, %v632
        %v634 = vpop.f32.mrf.mxu0
        %v635 = vadd.f32 0.0, %v634
        %636 = vmatmul.bf16.gmra.mxu0 %v613
        %v637 = vpop.f32.mrf.mxu0
        %v638 = vadd.f32 0.0, %v637
        %v639 = vpop.f32.mrf.mxu0
        %v640 = vadd.f32 0.0, %v639
        %641 = vmatmul.bf16.gmra.mxu0 %v616
        %v642 = vpop.f32.mrf.mxu0
        %v643 = vadd.f32 0.0, %v642
        %v644 = vpop.f32.mrf.mxu0
        %v645 = vadd.f32 0.0, %v644
        %646 = vdwg.mxu0
        %v647 = vmul.f32 %v628, 0.35355338
        %v648 = vmul.f32 %v630, 0.35355338
        %v649 = vmul.f32 %v633, 0.35355338
        %v650 = vmul.f32 %v635, 0.35355338
        %v651 = vmul.f32 %v638, 0.35355338
        %v652 = vmul.f32 %v640, 0.35355338
        %v653 = vmul.f32 %v643, 0.35355338
        %v654 = vmul.f32 %v645, 0.35355338
        %v655 = vperm.slane %v587, 0
        %v656 = vadd.f32 %v647, %v655
        %v657 = vadd.f32 %v648, %v655
        %v658 = vadd.f32 %v649, %v655
        %v659 = vadd.f32 %v650, %v655
        %v660 = vadd.f32 %v651, %v655
        %v661 = vadd.f32 %v652, %v655
        %v662 = vadd.f32 %v653, %v655
        %v663 = vadd.f32 %v654, %v655
        %v664 = vpack.c.bf16 %v522, %v521
        %v665 = vpack.c.bf16 %v524, %v523
        %v666 = vpack.c.bf16 %v526, %v525
        %v667 = vpack.c.bf16 %v528, %v527
        %v668 = vperm.slane %v587, 1
        %v673 = vunpack.c.l.b16 %v578
        %v674 = vunpack.c.l.b16 %v579
        %v675 = vunpack.c.l.b16 %v580
        %v676 = vunpack.c.l.b16 %v581
        %v677 = vpack.c.b16 %v674, %v673
        %v678 = vpack.c.b16 %v676, %v675
        %v682 = vsel %vm605, %v664, 0
        %v685 = vsel %vm605, %v665, 0
        %v688 = vsel %vm605, %v666, 0
        %v691 = vsel %vm605, %v667, 0
        %693 = vmatpush.bf16.msra.mxu0 0
        %694 = vmatpush.bf16.msra.mxu0 0
        %695 = vmatpush.bf16.msra.mxu0 0
        %696 = vmatpush.bf16.msra.mxu0 0
        %697 = vmatpush.bf16.msra.mxu0 0
        %698 = vmatpush.bf16.msra.mxu0 0
        %699 = vmatpush.bf16.msra.mxu0 %v678
        %700 = vmatpush.bf16.msra.mxu0 %v677
        %701 = vmatmul.bf16.gmra.mxu0 %v682
        %v702 = vpop.f32.mrf.mxu0
        %v703 = vadd.f32 %v668, %v702
        %v704 = vpop.f32.mrf.mxu0
        %v705 = vadd.f32 %v668, %v704
        %706 = vmatmul.bf16.gmra.mxu0 %v685
        %v707 = vpop.f32.mrf.mxu0
        %v708 = vadd.f32 %v668, %v707
        %v709 = vpop.f32.mrf.mxu0
        %v710 = vadd.f32 %v668, %v709
        %711 = vmatmul.bf16.gmra.mxu0 %v688
        %v712 = vpop.f32.mrf.mxu0
        %v713 = vadd.f32 %v668, %v712
        %v714 = vpop.f32.mrf.mxu0
        %v715 = vadd.f32 %v668, %v714
        %716 = vmatmul.bf16.gmra.mxu0 %v691
        %v717 = vpop.f32.mrf.mxu0
        %v718 = vadd.f32 %v668, %v717
        %v719 = vpop.f32.mrf.mxu0
        %v720 = vadd.f32 %v668, %v719
        %721 = vdwg.mxu0
        %v722 = vpack.c.bf16 %v558, %v557
        %v723 = vpack.c.bf16 %v560, %v559
        %v724 = vpack.c.bf16 %v562, %v561
        %v725 = vpack.c.bf16 %v564, %v563
        %v726 = vperm.slane %v587, 2
        %v731 = vunpack.c.l.b16 %v583
        %v732 = vunpack.c.l.b16 %v584
        %v733 = vunpack.c.l.b16 %v585
        %v734 = vunpack.c.l.b16 %v586
        %v735 = vpack.c.b16 %v732, %v731
        %v736 = vpack.c.b16 %v734, %v733
        %v740 = vsel %vm605, %v722, 0
        %v743 = vsel %vm605, %v723, 0
        %v746 = vsel %vm605, %v724, 0
        %v749 = vsel %vm605, %v725, 0
        %751 = vmatpush.bf16.msra.mxu0 0
        %752 = vmatpush.bf16.msra.mxu0 0
        %753 = vmatpush.bf16.msra.mxu0 0
        %754 = vmatpush.bf16.msra.mxu0 0
        %755 = vmatpush.bf16.msra.mxu0 0
        %756 = vmatpush.bf16.msra.mxu0 0
        %757 = vmatpush.bf16.msra.mxu0 %v736
        %758 = vmatpush.bf16.msra.mxu0 %v735
        %759 = vmatmul.bf16.gmra.mxu0 %v740
        %v760 = vpop.f32.mrf.mxu0
        %v761 = vadd.f32 %v726, %v760
        %v762 = vpop.f32.mrf.mxu0
        %v763 = vadd.f32 %v726, %v762
        %764 = vmatmul.bf16.gmra.mxu0 %v743
        %v765 = vpop.f32.mrf.mxu0
        %v766 = vadd.f32 %v726, %v765
        %v767 = vpop.f32.mrf.mxu0
        %v768 = vadd.f32 %v726, %v767
        %769 = vmatmul.bf16.gmra.mxu0 %v746
        %v770 = vpop.f32.mrf.mxu0
        %v771 = vadd.f32 %v726, %v770
        %v772 = vpop.f32.mrf.mxu0
        %v773 = vadd.f32 %v726, %v772
        %774 = vmatmul.bf16.gmra.mxu0 %v749
        %v775 = vpop.f32.mrf.mxu0
        %v776 = vadd.f32 %v726, %v775
        %v777 = vpop.f32.mrf.mxu0
        %v778 = vadd.f32 %v726, %v777
        %779 = vdwg.mxu0
        %v780 = vpack.c.bf16 %v656, %v656
        %v781 = vpack.c.bf16 %v657, %v657
        %v782 = vpack.c.bf16 %v658, %v658
        %v783 = vpack.c.bf16 %v659, %v659
        %v784 = vpack.c.bf16 %v660, %v660
        %v785 = vpack.c.bf16 %v661, %v661
        %v786 = vpack.c.bf16 %v662, %v662
        %v787 = vpack.c.bf16 %v663, %v663
        %v788 = vpack.c.bf16 %v703, %v703
        %v789 = vpack.c.bf16 %v705, %v705
        %v790 = vpack.c.bf16 %v708, %v708
        %v791 = vpack.c.bf16 %v710, %v710
        %v792 = vpack.c.bf16 %v713, %v713
        %v793 = vpack.c.bf16 %v715, %v715
        %v794 = vpack.c.bf16 %v718, %v718
        %v795 = vpack.c.bf16 %v720, %v720
        %v796 = vpack.c.bf16 %v761, %v761
        %v797 = vpack.c.bf16 %v763, %v763
        %v798 = vpack.c.bf16 %v766, %v766
        %v799 = vpack.c.bf16 %v768, %v768
        %v800 = vpack.c.bf16 %v771, %v771
        %v801 = vpack.c.bf16 %v773, %v773
        %v802 = vpack.c.bf16 %v776, %v776
        %v803 = vpack.c.bf16 %v778, %v778
        %v812 = vunpack.c.l.b16 %v780
        %v813 = vunpack.c.l.b16 %v781
        %v814 = vunpack.c.l.b16 %v782
        %v815 = vunpack.c.l.b16 %v783
        %v816 = vunpack.c.l.b16 %v784
        %v817 = vunpack.c.l.b16 %v785
        %v818 = vunpack.c.l.b16 %v786
        %v819 = vunpack.c.l.b16 %v787
        %v820 = vpack.c.b16 %v813, %v812
        %v821 = vpack.c.b16 %v815, %v814
        %v822 = vpack.c.b16 %v817, %v816
        %v823 = vpack.c.b16 %v819, %v818
        %v832 = vunpack.c.l.b16 %v788
        %v833 = vunpack.c.l.b16 %v789
        %v834 = vunpack.c.l.b16 %v790
        %v835 = vunpack.c.l.b16 %v791
        %v836 = vunpack.c.l.b16 %v792
        %v837 = vunpack.c.l.b16 %v793
        %v838 = vunpack.c.l.b16 %v794
        %v839 = vunpack.c.l.b16 %v795
        %v840 = vpack.c.b16 %v833, %v832
        %v841 = vpack.c.b16 %v835, %v834
        %v842 = vpack.c.b16 %v837, %v836
        %v843 = vpack.c.b16 %v839, %v838
        %vm844 = vcmask 64512
        %v846 = vsel %vm844, %v820, 0
        %v849 = vsel %vm844, %v821, 0
        %v852 = vsel %vm844, %v822, 0
        %v855 = vsel %vm844, %v823, 0
        %v858 = vsel %vm844, %v840, 0
        %v861 = vsel %vm844, %v841, 0
        %v864 = vsel %vm844, %v842, 0
        %v867 = vsel %vm844, %v843, 0
        %869 = vmatpush.bf16.xpose.msra.mxu0 0
        %870 = vmatpush.bf16.xpose.msra.mxu0 0
        %871 = vmatpush.bf16.xpose.msra.mxu0 0
        %872 = vmatpush.bf16.xpose.msra.mxu0 0
        %873 = vmatpush.bf16.xpose.msra.mxu0 %v867
        %874 = vmatpush.bf16.xpose.msra.mxu0 %v864
        %875 = vmatpush.bf16.xpose.msra.mxu0 %v861
        %876 = vmatpush.bf16.xpose.msra.mxu0 %v858
        %877 = vmatmul.bf16.gmra.mxu0 %v846
        %v878 = vpop.f32.mrf.mxu0
        %v879 = vadd.f32 0.0, %v878
        %v880 = vpop.f32.mrf.mxu0
        %v881 = vadd.f32 0.0, %v880
        %882 = vmatmul.bf16.gmra.mxu0 %v849
        %v883 = vpop.f32.mrf.mxu0
        %v884 = vadd.f32 0.0, %v883
        %v885 = vpop.f32.mrf.mxu0
        %v886 = vadd.f32 0.0, %v885
        %887 = vmatmul.bf16.gmra.mxu0 %v852
        %v888 = vpop.f32.mrf.mxu0
        %v889 = vadd.f32 0.0, %v888
        %v890 = vpop.f32.mrf.mxu0
        %v891 = vadd.f32 0.0, %v890
        %892 = vmatmul.bf16.gmra.mxu0 %v855
        %v893 = vpop.f32.mrf.mxu0
        %v894 = vadd.f32 0.0, %v893
        %v895 = vpop.f32.mrf.mxu0
        %v896 = vadd.f32 0.0, %v895
        %897 = vdwg.mxu0
        %vm898 = vcmask 523264
        %v899 = vsel %vm898, %v879, -inf
        %900 = vmax.xlane.f32.xlu0 %v899
        %v901 = vpop.xlane.xlu0 %900
        %v902 = vsel %vm898, %v881, -inf
        %903 = vmax.xlane.f32.xlu0 %v902
        %v904 = vpop.xlane.xlu0 %903
        %v905 = vsel %vm898, %v884, -inf
        %906 = vmax.xlane.f32.xlu0 %v905
        %v907 = vpop.xlane.xlu0 %906
        %v908 = vsel %vm898, %v886, -inf
        %909 = vmax.xlane.f32.xlu0 %v908
        %v910 = vpop.xlane.xlu0 %909
        %v911 = vsel %vm898, %v889, -inf
        %912 = vmax.xlane.f32.xlu0 %v911
        %v913 = vpop.xlane.xlu0 %912
        %v914 = vsel %vm898, %v891, -inf
        %915 = vmax.xlane.f32.xlu0 %v914
        %v916 = vpop.xlane.xlu0 %915
        %v917 = vsel %vm898, %v894, -inf
        %918 = vmax.xlane.f32.xlu0 %v917
        %v919 = vpop.xlane.xlu0 %918
        %v920 = vsel %vm898, %v896, -inf
        %921 = vmax.xlane.f32.xlu0 %v920
        %v922 = vpop.xlane.xlu0 %921
        %v923 = vsub.f32 %v879, %v901
        %v924 = vsub.f32 %v881, %v904
        %v925 = vsub.f32 %v884, %v907
        %v926 = vsub.f32 %v886, %v910
        %v927 = vsub.f32 %v889, %v913
        %v928 = vsub.f32 %v891, %v916
        %v929 = vsub.f32 %v894, %v919
        %v930 = vsub.f32 %v896, %v922
        %v931 = vmul.f32 %v923, 1.442695
        %v932 = vpow.pop %v931
        %v933 = vmul.f32 %v924, 1.442695
        %v934 = vpow.pop %v933
        %v935 = vmul.f32 %v925, 1.442695
        %v936 = vpow.pop %v935
        %v937 = vmul.f32 %v926, 1.442695
        %v938 = vpow.pop %v937
        %v939 = vmul.f32 %v927, 1.442695
        %v940 = vpow.pop %v939
        %v941 = vmul.f32 %v928, 1.442695
        %v942 = vpow.pop %v941
        %v943 = vmul.f32 %v929, 1.442695
        %v944 = vpow.pop %v943
        %v945 = vmul.f32 %v930, 1.442695
        %v946 = vpow.pop %v945
        %v947 = vsel %vm898, %v932, 0.0
        %948 = vadd.xlane.f32.xlu0 %v947
        %v949 = vpop.xlane.xlu0 %948
        %v950 = vsel %vm898, %v934, 0.0
        %951 = vadd.xlane.f32.xlu0 %v950
        %v952 = vpop.xlane.xlu0 %951
        %v953 = vsel %vm898, %v936, 0.0
        %954 = vadd.xlane.f32.xlu0 %v953
        %v955 = vpop.xlane.xlu0 %954
        %v956 = vsel %vm898, %v938, 0.0
        %957 = vadd.xlane.f32.xlu0 %v956
        %v958 = vpop.xlane.xlu0 %957
        %v959 = vsel %vm898, %v940, 0.0
        %960 = vadd.xlane.f32.xlu0 %v959
        %v961 = vpop.xlane.xlu0 %960
        %v962 = vsel %vm898, %v942, 0.0
        %963 = vadd.xlane.f32.xlu0 %v962
        %v964 = vpop.xlane.xlu0 %963
        %v965 = vsel %vm898, %v944, 0.0
        %966 = vadd.xlane.f32.xlu0 %v965
        %v967 = vpop.xlane.xlu0 %966
        %v968 = vsel %vm898, %v946, 0.0
        %969 = vadd.xlane.f32.xlu0 %v968
        %v970 = vpop.xlane.xlu0 %969
        %v971 = vrcp.pop %v949
        %v972 = vrcp.pop %v952
        %v973 = vrcp.pop %v955
        %v974 = vrcp.pop %v958
        %v975 = vrcp.pop %v961
        %v976 = vrcp.pop %v964
        %v977 = vrcp.pop %v967
        %v978 = vrcp.pop %v970
        %v979 = vmul.f32 %v932, %v971
        %v980 = vmul.f32 %v934, %v972
        %v981 = vmul.f32 %v936, %v973
        %v982 = vmul.f32 %v938, %v974
        %v983 = vmul.f32 %v940, %v975
        %v984 = vmul.f32 %v942, %v976
        %v985 = vmul.f32 %v944, %v977
        %v986 = vmul.f32 %v946, %v978
        %v987 = vpack.c.bf16 %v980, %v979
        %v988 = vpack.c.bf16 %v982, %v981
        %v989 = vpack.c.bf16 %v984, %v983
        %v990 = vpack.c.bf16 %v986, %v985
        %v999 = vunpack.c.l.b16 %v796
        %v1000 = vunpack.c.l.b16 %v797
        %v1001 = vunpack.c.l.b16 %v798
        %v1002 = vunpack.c.l.b16 %v799
        %v1003 = vunpack.c.l.b16 %v800
        %v1004 = vunpack.c.l.b16 %v801
        %v1005 = vunpack.c.l.b16 %v802
        %v1006 = vunpack.c.l.b16 %v803
        %v1007 = vpack.c.b16 %v1000, %v999
        %v1008 = vpack.c.b16 %v1002, %v1001
        %v1009 = vpack.c.b16 %v1004, %v1003
        %v1010 = vpack.c.b16 %v1006, %v1005
        %v1016 = vsel %vm898, %v987, 0
        %v1019 = vsel %vm898, %v988, 0
        %v1022 = vsel %vm898, %v989, 0
        %v1025 = vsel %vm898, %v990, 0
        %1027 = vmatpush.bf16.msra.mxu0 0
        %1028 = vmatpush.bf16.msra.mxu0 0
        %1029 = vmatpush.bf16.msra.mxu0 0
        %1030 = vmatpush.bf16.msra.mxu0 0
        %1031 = vmatpush.bf16.msra.mxu0 %v1010
        %1032 = vmatpush.bf16.msra.mxu0 %v1009
        %1033 = vmatpush.bf16.msra.mxu0 %v1008
        %1034 = vmatpush.bf16.msra.mxu0 %v1007
        %1035 = vmatmul.bf16.gmra.mxu0 %v1016
        %v1036 = vpop.f32.mrf.mxu0
        %v1037 = vadd.f32 0.0, %v1036
        %v1038 = vpop.f32.mrf.mxu0
        %v1039 = vadd.f32 0.0, %v1038
        %1040 = vmatmul.bf16.gmra.mxu0 %v1019
        %v1041 = vpop.f32.mrf.mxu0
        %v1042 = vadd.f32 0.0, %v1041
        %v1043 = vpop.f32.mrf.mxu0
        %v1044 = vadd.f32 0.0, %v1043
        %1045 = vmatmul.bf16.gmra.mxu0 %v1022
        %v1046 = vpop.f32.mrf.mxu0
        %v1047 = vadd.f32 0.0, %v1046
        %v1048 = vpop.f32.mrf.mxu0
        %v1049 = vadd.f32 0.0, %v1048
        %1050 = vmatmul.bf16.gmra.mxu0 %v1025
        %v1051 = vpop.f32.mrf.mxu0
        %v1052 = vadd.f32 0.0, %v1051
        %v1053 = vpop.f32.mrf.mxu0
        %v1054 = vadd.f32 0.0, %v1053
        %1055 = vdwg.mxu0
        %1056 = vrot.lane.b32.xlu0 %v820, 120
        %v1057 = vpop.permute.xlu0 %1056
        %1058 = vrot.lane.b32.xlu0 %v821, 120
        %v1059 = vpop.permute.xlu0 %1058
        %1060 = vrot.lane.b32.xlu0 %v822, 120
        %v1061 = vpop.permute.xlu0 %1060
        %1062 = vrot.lane.b32.xlu0 %v823, 120
        %v1063 = vpop.permute.xlu0 %1062
        %1064 = vrot.lane.b32.xlu0 %v840, 120
        %v1065 = vpop.permute.xlu0 %1064
        %1066 = vrot.lane.b32.xlu0 %v841, 120
        %v1067 = vpop.permute.xlu0 %1066
        %1068 = vrot.lane.b32.xlu0 %v842, 120
        %v1069 = vpop.permute.xlu0 %1068
        %1070 = vrot.lane.b32.xlu0 %v843, 120
        %v1071 = vpop.permute.xlu0 %1070
        %v1073 = vsel %vm844, %v1057, 0
        %v1076 = vsel %vm844, %v1059, 0
        %v1079 = vsel %vm844, %v1061, 0
        %v1082 = vsel %vm844, %v1063, 0
        %v1085 = vsel %vm844, %v1065, 0
        %v1088 = vsel %vm844, %v1067, 0
        %v1091 = vsel %vm844, %v1069, 0
        %v1094 = vsel %vm844, %v1071, 0
        %1096 = vmatpush.bf16.xpose.msra.mxu0 0
        %1097 = vmatpush.bf16.xpose.msra.mxu0 0
        %1098 = vmatpush.bf16.xpose.msra.mxu0 0
        %1099 = vmatpush.bf16.xpose.msra.mxu0 0
        %1100 = vmatpush.bf16.xpose.msra.mxu0 %v1094
        %1101 = vmatpush.bf16.xpose.msra.mxu0 %v1091
        %1102 = vmatpush.bf16.xpose.msra.mxu0 %v1088
        %1103 = vmatpush.bf16.xpose.msra.mxu0 %v1085
        %1104 = vmatmul.bf16.gmra.mxu0 %v1073
        %v1105 = vpop.f32.mrf.mxu0
        %v1106 = vadd.f32 0.0, %v1105
        %v1107 = vpop.f32.mrf.mxu0
        %v1108 = vadd.f32 0.0, %v1107
        %1109 = vmatmul.bf16.gmra.mxu0 %v1076
        %v1110 = vpop.f32.mrf.mxu0
        %v1111 = vadd.f32 0.0, %v1110
        %v1112 = vpop.f32.mrf.mxu0
        %v1113 = vadd.f32 0.0, %v1112
        %1114 = vmatmul.bf16.gmra.mxu0 %v1079
        %v1115 = vpop.f32.mrf.mxu0
        %v1116 = vadd.f32 0.0, %v1115
        %v1117 = vpop.f32.mrf.mxu0
        %v1118 = vadd.f32 0.0, %v1117
        %1119 = vmatmul.bf16.gmra.mxu0 %v1082
        %v1120 = vpop.f32.mrf.mxu0
        %v1121 = vadd.f32 0.0, %v1120
        %v1122 = vpop.f32.mrf.mxu0
        %v1123 = vadd.f32 0.0, %v1122
        %1124 = vdwg.mxu0
        %v1125 = vsel %vm898, %v1106, -inf
        %1126 = vmax.xlane.f32.xlu0 %v1125
        %v1127 = vpop.xlane.xlu0 %1126
        %v1128 = vsel %vm898, %v1108, -inf
        %1129 = vmax.xlane.f32.xlu0 %v1128
        %v1130 = vpop.xlane.xlu0 %1129
        %v1131 = vsel %vm898, %v1111, -inf
        %1132 = vmax.xlane.f32.xlu0 %v1131
        %v1133 = vpop.xlane.xlu0 %1132
        %v1134 = vsel %vm898, %v1113, -inf
        %1135 = vmax.xlane.f32.xlu0 %v1134
        %v1136 = vpop.xlane.xlu0 %1135
        %v1137 = vsel %vm898, %v1116, -inf
        %1138 = vmax.xlane.f32.xlu0 %v1137
        %v1139 = vpop.xlane.xlu0 %1138
        %v1140 = vsel %vm898, %v1118, -inf
        %1141 = vmax.xlane.f32.xlu0 %v1140
        %v1142 = vpop.xlane.xlu0 %1141
        %v1143 = vsel %vm898, %v1121, -inf
        %1144 = vmax.xlane.f32.xlu0 %v1143
        %v1145 = vpop.xlane.xlu0 %1144
        %v1146 = vsel %vm898, %v1123, -inf
        %1147 = vmax.xlane.f32.xlu0 %v1146
        %v1148 = vpop.xlane.xlu0 %1147
        %v1149 = vsub.f32 %v1106, %v1127
        %v1150 = vsub.f32 %v1108, %v1130
        %v1151 = vsub.f32 %v1111, %v1133
        %v1152 = vsub.f32 %v1113, %v1136
        %v1153 = vsub.f32 %v1116, %v1139
        %v1154 = vsub.f32 %v1118, %v1142
        %v1155 = vsub.f32 %v1121, %v1145
        %v1156 = vsub.f32 %v1123, %v1148
        %v1157 = vmul.f32 %v1149, 1.442695
        %v1158 = vpow.pop %v1157
        %v1159 = vmul.f32 %v1150, 1.442695
        %v1160 = vpow.pop %v1159
        %v1161 = vmul.f32 %v1151, 1.442695
        %v1162 = vpow.pop %v1161
        %v1163 = vmul.f32 %v1152, 1.442695
        %v1164 = vpow.pop %v1163
        %v1165 = vmul.f32 %v1153, 1.442695
        %v1166 = vpow.pop %v1165
        %v1167 = vmul.f32 %v1154, 1.442695
        %v1168 = vpow.pop %v1167
        %v1169 = vmul.f32 %v1155, 1.442695
        %v1170 = vpow.pop %v1169
        %v1171 = vmul.f32 %v1156, 1.442695
        %v1172 = vpow.pop %v1171
        %v1173 = vsel %vm898, %v1158, 0.0
        %1174 = vadd.xlane.f32.xlu0 %v1173
        %v1175 = vpop.xlane.xlu0 %1174
        %v1176 = vsel %vm898, %v1160, 0.0
        %1177 = vadd.xlane.f32.xlu0 %v1176
        %v1178 = vpop.xlane.xlu0 %1177
        %v1179 = vsel %vm898, %v1162, 0.0
        %1180 = vadd.xlane.f32.xlu0 %v1179
        %v1181 = vpop.xlane.xlu0 %1180
        %v1182 = vsel %vm898, %v1164, 0.0
        %1183 = vadd.xlane.f32.xlu0 %v1182
        %v1184 = vpop.xlane.xlu0 %1183
        %v1185 = vsel %vm898, %v1166, 0.0
        %1186 = vadd.xlane.f32.xlu0 %v1185
        %v1187 = vpop.xlane.xlu0 %1186
        %v1188 = vsel %vm898, %v1168, 0.0
        %1189 = vadd.xlane.f32.xlu0 %v1188
        %v1190 = vpop.xlane.xlu0 %1189
        %v1191 = vsel %vm898, %v1170, 0.0
        %1192 = vadd.xlane.f32.xlu0 %v1191
        %v1193 = vpop.xlane.xlu0 %1192
        %v1194 = vsel %vm898, %v1172, 0.0
        %1195 = vadd.xlane.f32.xlu0 %v1194
        %v1196 = vpop.xlane.xlu0 %1195
        %v1197 = vrcp.pop %v1175
        %v1198 = vrcp.pop %v1178
        %v1199 = vrcp.pop %v1181
        %v1200 = vrcp.pop %v1184
        %v1201 = vrcp.pop %v1187
        %v1202 = vrcp.pop %v1190
        %v1203 = vrcp.pop %v1193
        %v1204 = vrcp.pop %v1196
        %v1205 = vmul.f32 %v1158, %v1197
        %v1206 = vmul.f32 %v1160, %v1198
        %v1207 = vmul.f32 %v1162, %v1199
        %v1208 = vmul.f32 %v1164, %v1200
        %v1209 = vmul.f32 %v1166, %v1201
        %v1210 = vmul.f32 %v1168, %v1202
        %v1211 = vmul.f32 %v1170, %v1203
        %v1212 = vmul.f32 %v1172, %v1204
        %v1213 = vpack.c.bf16 %v1206, %v1205
        %v1214 = vpack.c.bf16 %v1208, %v1207
        %v1215 = vpack.c.bf16 %v1210, %v1209
        %v1216 = vpack.c.bf16 %v1212, %v1211
        %1217 = vrot.lane.b32.xlu0 %v1007, 120
        %v1218 = vpop.permute.xlu0 %1217
        %1219 = vrot.lane.b32.xlu0 %v1008, 120
        %v1220 = vpop.permute.xlu0 %1219
        %1221 = vrot.lane.b32.xlu0 %v1009, 120
        %v1222 = vpop.permute.xlu0 %1221
        %1223 = vrot.lane.b32.xlu0 %v1010, 120
        %v1224 = vpop.permute.xlu0 %1223
        %v1230 = vsel %vm898, %v1213, 0
        %v1233 = vsel %vm898, %v1214, 0
        %v1236 = vsel %vm898, %v1215, 0
        %v1239 = vsel %vm898, %v1216, 0
        %1241 = vmatpush.bf16.msra.mxu0 0
        %1242 = vmatpush.bf16.msra.mxu0 0
        %1243 = vmatpush.bf16.msra.mxu0 0
        %1244 = vmatpush.bf16.msra.mxu0 0
        %1245 = vmatpush.bf16.msra.mxu0 %v1224
        %1246 = vmatpush.bf16.msra.mxu0 %v1222
        %1247 = vmatpush.bf16.msra.mxu0 %v1220
        %1248 = vmatpush.bf16.msra.mxu0 %v1218
        %1249 = vmatmul.bf16.gmra.mxu0 %v1230
        %v1250 = vpop.f32.mrf.mxu0
        %v1251 = vadd.f32 0.0, %v1250
        %v1252 = vpop.f32.mrf.mxu0
        %v1253 = vadd.f32 0.0, %v1252
        %1254 = vmatmul.bf16.gmra.mxu0 %v1233
        %v1255 = vpop.f32.mrf.mxu0
        %v1256 = vadd.f32 0.0, %v1255
        %v1257 = vpop.f32.mrf.mxu0
        %v1258 = vadd.f32 0.0, %v1257
        %1259 = vmatmul.bf16.gmra.mxu0 %v1236
        %v1260 = vpop.f32.mrf.mxu0
        %v1261 = vadd.f32 0.0, %v1260
        %v1262 = vpop.f32.mrf.mxu0
        %v1263 = vadd.f32 0.0, %v1262
        %1264 = vmatmul.bf16.gmra.mxu0 %v1239
        %v1265 = vpop.f32.mrf.mxu0
        %v1266 = vadd.f32 0.0, %v1265
        %v1267 = vpop.f32.mrf.mxu0
        %v1268 = vadd.f32 0.0, %v1267
        %1269 = vdwg.mxu0
        %1270 = vrot.lane.b32.xlu0 %v820, 112
        %v1271 = vpop.permute.xlu0 %1270
        %1272 = vrot.lane.b32.xlu0 %v821, 112
        %v1273 = vpop.permute.xlu0 %1272
        %1274 = vrot.lane.b32.xlu0 %v822, 112
        %v1275 = vpop.permute.xlu0 %1274
        %1276 = vrot.lane.b32.xlu0 %v823, 112
        %v1277 = vpop.permute.xlu0 %1276
        %1278 = vrot.lane.b32.xlu0 %v840, 112
        %v1279 = vpop.permute.xlu0 %1278
        %1280 = vrot.lane.b32.xlu0 %v841, 112
        %v1281 = vpop.permute.xlu0 %1280
        %1282 = vrot.lane.b32.xlu0 %v842, 112
        %v1283 = vpop.permute.xlu0 %1282
        %1284 = vrot.lane.b32.xlu0 %v843, 112
        %v1285 = vpop.permute.xlu0 %1284
        %v1287 = vsel %vm844, %v1271, 0
        %v1290 = vsel %vm844, %v1273, 0
        %v1293 = vsel %vm844, %v1275, 0
        %v1296 = vsel %vm844, %v1277, 0
        %v1299 = vsel %vm844, %v1279, 0
        %v1302 = vsel %vm844, %v1281, 0
        %v1305 = vsel %vm844, %v1283, 0
        %v1308 = vsel %vm844, %v1285, 0
        %1310 = vmatpush.bf16.xpose.msra.mxu0 0
        %1311 = vmatpush.bf16.xpose.msra.mxu0 0
        %1312 = vmatpush.bf16.xpose.msra.mxu0 0
        %1313 = vmatpush.bf16.xpose.msra.mxu0 0
        %1314 = vmatpush.bf16.xpose.msra.mxu0 %v1308
        %1315 = vmatpush.bf16.xpose.msra.mxu0 %v1305
        %1316 = vmatpush.bf16.xpose.msra.mxu0 %v1302
        %1317 = vmatpush.bf16.xpose.msra.mxu0 %v1299
        %1318 = vmatmul.bf16.gmra.mxu0 %v1287
        %v1319 = vpop.f32.mrf.mxu0
        %v1320 = vadd.f32 0.0, %v1319
        %v1321 = vpop.f32.mrf.mxu0
        %v1322 = vadd.f32 0.0, %v1321
        %1323 = vmatmul.bf16.gmra.mxu0 %v1290
        %v1324 = vpop.f32.mrf.mxu0
        %v1325 = vadd.f32 0.0, %v1324
        %v1326 = vpop.f32.mrf.mxu0
        %v1327 = vadd.f32 0.0, %v1326
        %1328 = vmatmul.bf16.gmra.mxu0 %v1293
        %v1329 = vpop.f32.mrf.mxu0
        %v1330 = vadd.f32 0.0, %v1329
        %v1331 = vpop.f32.mrf.mxu0
        %v1332 = vadd.f32 0.0, %v1331
        %1333 = vmatmul.bf16.gmra.mxu0 %v1296
        %v1334 = vpop.f32.mrf.mxu0
        %v1335 = vadd.f32 0.0, %v1334
        %v1336 = vpop.f32.mrf.mxu0
        %v1337 = vadd.f32 0.0, %v1336
        %1338 = vdwg.mxu0
        %v1339 = vsel %vm898, %v1320, -inf
        %1340 = vmax.xlane.f32.xlu0 %v1339
        %v1341 = vpop.xlane.xlu0 %1340
        %v1342 = vsel %vm898, %v1322, -inf
        %1343 = vmax.xlane.f32.xlu0 %v1342
        %v1344 = vpop.xlane.xlu0 %1343
        %v1345 = vsel %vm898, %v1325, -inf
        %1346 = vmax.xlane.f32.xlu0 %v1345
        %v1347 = vpop.xlane.xlu0 %1346
        %v1348 = vsel %vm898, %v1327, -inf
        %1349 = vmax.xlane.f32.xlu0 %v1348
        %v1350 = vpop.xlane.xlu0 %1349
        %v1351 = vsel %vm898, %v1330, -inf
        %1352 = vmax.xlane.f32.xlu0 %v1351
        %v1353 = vpop.xlane.xlu0 %1352
        %v1354 = vsel %vm898, %v1332, -inf
        %1355 = vmax.xlane.f32.xlu0 %v1354
        %v1356 = vpop.xlane.xlu0 %1355
        %v1357 = vsel %vm898, %v1335, -inf
        %1358 = vmax.xlane.f32.xlu0 %v1357
        %v1359 = vpop.xlane.xlu0 %1358
        %v1360 = vsel %vm898, %v1337, -inf
        %1361 = vmax.xlane.f32.xlu0 %v1360
        %v1362 = vpop.xlane.xlu0 %1361
        %v1363 = vsub.f32 %v1320, %v1341
        %v1364 = vsub.f32 %v1322, %v1344
        %v1365 = vsub.f32 %v1325, %v1347
        %v1366 = vsub.f32 %v1327, %v1350
        %v1367 = vsub.f32 %v1330, %v1353
        %v1368 = vsub.f32 %v1332, %v1356
        %v1369 = vsub.f32 %v1335, %v1359
        %v1370 = vsub.f32 %v1337, %v1362
        %v1371 = vmul.f32 %v1363, 1.442695
        %v1372 = vpow.pop %v1371
        %v1373 = vmul.f32 %v1364, 1.442695
        %v1374 = vpow.pop %v1373
        %v1375 = vmul.f32 %v1365, 1.442695
        %v1376 = vpow.pop %v1375
        %v1377 = vmul.f32 %v1366, 1.442695
        %v1378 = vpow.pop %v1377
        %v1379 = vmul.f32 %v1367, 1.442695
        %v1380 = vpow.pop %v1379
        %v1381 = vmul.f32 %v1368, 1.442695
        %v1382 = vpow.pop %v1381
        %v1383 = vmul.f32 %v1369, 1.442695
        %v1384 = vpow.pop %v1383
        %v1385 = vmul.f32 %v1370, 1.442695
        %v1386 = vpow.pop %v1385
        %v1387 = vsel %vm898, %v1372, 0.0
        %1388 = vadd.xlane.f32.xlu0 %v1387
        %v1389 = vpop.xlane.xlu0 %1388
        %v1390 = vsel %vm898, %v1374, 0.0
        %1391 = vadd.xlane.f32.xlu0 %v1390
        %v1392 = vpop.xlane.xlu0 %1391
        %v1393 = vsel %vm898, %v1376, 0.0
        %1394 = vadd.xlane.f32.xlu0 %v1393
        %v1395 = vpop.xlane.xlu0 %1394
        %v1396 = vsel %vm898, %v1378, 0.0
        %1397 = vadd.xlane.f32.xlu0 %v1396
        %v1398 = vpop.xlane.xlu0 %1397
        %v1399 = vsel %vm898, %v1380, 0.0
        %1400 = vadd.xlane.f32.xlu0 %v1399
        %v1401 = vpop.xlane.xlu0 %1400
        %v1402 = vsel %vm898, %v1382, 0.0
        %1403 = vadd.xlane.f32.xlu0 %v1402
        %v1404 = vpop.xlane.xlu0 %1403
        %v1405 = vsel %vm898, %v1384, 0.0
        %1406 = vadd.xlane.f32.xlu0 %v1405
        %v1407 = vpop.xlane.xlu0 %1406
        %v1408 = vsel %vm898, %v1386, 0.0
        %1409 = vadd.xlane.f32.xlu0 %v1408
        %v1410 = vpop.xlane.xlu0 %1409
        %v1411 = vrcp.pop %v1389
        %v1412 = vrcp.pop %v1392
        %v1413 = vrcp.pop %v1395
        %v1414 = vrcp.pop %v1398
        %v1415 = vrcp.pop %v1401
        %v1416 = vrcp.pop %v1404
        %v1417 = vrcp.pop %v1407
        %v1418 = vrcp.pop %v1410
        %v1419 = vmul.f32 %v1372, %v1411
        %v1420 = vmul.f32 %v1374, %v1412
        %v1421 = vmul.f32 %v1376, %v1413
        %v1422 = vmul.f32 %v1378, %v1414
        %v1423 = vmul.f32 %v1380, %v1415
        %v1424 = vmul.f32 %v1382, %v1416
        %v1425 = vmul.f32 %v1384, %v1417
        %v1426 = vmul.f32 %v1386, %v1418
        %v1427 = vpack.c.bf16 %v1420, %v1419
        %v1428 = vpack.c.bf16 %v1422, %v1421
        %v1429 = vpack.c.bf16 %v1424, %v1423
        %v1430 = vpack.c.bf16 %v1426, %v1425
        %1431 = vrot.lane.b32.xlu0 %v1007, 112
        %v1432 = vpop.permute.xlu0 %1431
        %1433 = vrot.lane.b32.xlu0 %v1008, 112
        %v1434 = vpop.permute.xlu0 %1433
        %1435 = vrot.lane.b32.xlu0 %v1009, 112
        %v1436 = vpop.permute.xlu0 %1435
        %1437 = vrot.lane.b32.xlu0 %v1010, 112
        %v1438 = vpop.permute.xlu0 %1437
        %v1444 = vsel %vm898, %v1427, 0
        %v1447 = vsel %vm898, %v1428, 0
        %v1450 = vsel %vm898, %v1429, 0
        %v1453 = vsel %vm898, %v1430, 0
        %1455 = vmatpush.bf16.msra.mxu0 0
        %1456 = vmatpush.bf16.msra.mxu0 0
        %1457 = vmatpush.bf16.msra.mxu0 0
        %1458 = vmatpush.bf16.msra.mxu0 0
        %1459 = vmatpush.bf16.msra.mxu0 %v1438
        %1460 = vmatpush.bf16.msra.mxu0 %v1436
        %1461 = vmatpush.bf16.msra.mxu0 %v1434
        %1462 = vmatpush.bf16.msra.mxu0 %v1432
        %1463 = vmatmul.bf16.gmra.mxu0 %v1444
        %v1464 = vpop.f32.mrf.mxu0
        %v1465 = vadd.f32 0.0, %v1464
        %v1466 = vpop.f32.mrf.mxu0
        %v1467 = vadd.f32 0.0, %v1466
        %1468 = vmatmul.bf16.gmra.mxu0 %v1447
        %v1469 = vpop.f32.mrf.mxu0
        %v1470 = vadd.f32 0.0, %v1469
        %v1471 = vpop.f32.mrf.mxu0
        %v1472 = vadd.f32 0.0, %v1471
        %1473 = vmatmul.bf16.gmra.mxu0 %v1450
        %v1474 = vpop.f32.mrf.mxu0
        %v1475 = vadd.f32 0.0, %v1474
        %v1476 = vpop.f32.mrf.mxu0
        %v1477 = vadd.f32 0.0, %v1476
        %1478 = vmatmul.bf16.gmra.mxu0 %v1453
        %v1479 = vpop.f32.mrf.mxu0
        %v1480 = vadd.f32 0.0, %v1479
        %v1481 = vpop.f32.mrf.mxu0
        %v1482 = vadd.f32 0.0, %v1481
        %1483 = vdwg.mxu0
        %1484 = vrot.lane.b32.xlu0 %v820, 104
        %v1485 = vpop.permute.xlu0 %1484
        %1486 = vrot.lane.b32.xlu0 %v821, 104
        %v1487 = vpop.permute.xlu0 %1486
        %1488 = vrot.lane.b32.xlu0 %v822, 104
        %v1489 = vpop.permute.xlu0 %1488
        %1490 = vrot.lane.b32.xlu0 %v823, 104
        %v1491 = vpop.permute.xlu0 %1490
        %1492 = vrot.lane.b32.xlu0 %v840, 104
        %v1493 = vpop.permute.xlu0 %1492
        %1494 = vrot.lane.b32.xlu0 %v841, 104
        %v1495 = vpop.permute.xlu0 %1494
        %1496 = vrot.lane.b32.xlu0 %v842, 104
        %v1497 = vpop.permute.xlu0 %1496
        %1498 = vrot.lane.b32.xlu0 %v843, 104
        %v1499 = vpop.permute.xlu0 %1498
        %v1501 = vsel %vm844, %v1485, 0
        %v1504 = vsel %vm844, %v1487, 0
        %v1507 = vsel %vm844, %v1489, 0
        %v1510 = vsel %vm844, %v1491, 0
        %v1513 = vsel %vm844, %v1493, 0
        %v1516 = vsel %vm844, %v1495, 0
        %v1519 = vsel %vm844, %v1497, 0
        %v1522 = vsel %vm844, %v1499, 0
        %1524 = vmatpush.bf16.xpose.msra.mxu0 0
        %1525 = vmatpush.bf16.xpose.msra.mxu0 0
        %1526 = vmatpush.bf16.xpose.msra.mxu0 0
        %1527 = vmatpush.bf16.xpose.msra.mxu0 0
        %1528 = vmatpush.bf16.xpose.msra.mxu0 %v1522
        %1529 = vmatpush.bf16.xpose.msra.mxu0 %v1519
        %1530 = vmatpush.bf16.xpose.msra.mxu0 %v1516
        %1531 = vmatpush.bf16.xpose.msra.mxu0 %v1513
        %1532 = vmatmul.bf16.gmra.mxu0 %v1501
        %v1533 = vpop.f32.mrf.mxu0
        %v1534 = vadd.f32 0.0, %v1533
        %v1535 = vpop.f32.mrf.mxu0
        %v1536 = vadd.f32 0.0, %v1535
        %1537 = vmatmul.bf16.gmra.mxu0 %v1504
        %v1538 = vpop.f32.mrf.mxu0
        %v1539 = vadd.f32 0.0, %v1538
        %v1540 = vpop.f32.mrf.mxu0
        %v1541 = vadd.f32 0.0, %v1540
        %1542 = vmatmul.bf16.gmra.mxu0 %v1507
        %v1543 = vpop.f32.mrf.mxu0
        %v1544 = vadd.f32 0.0, %v1543
        %v1545 = vpop.f32.mrf.mxu0
        %v1546 = vadd.f32 0.0, %v1545
        %1547 = vmatmul.bf16.gmra.mxu0 %v1510
        %v1548 = vpop.f32.mrf.mxu0
        %v1549 = vadd.f32 0.0, %v1548
        %v1550 = vpop.f32.mrf.mxu0
        %v1551 = vadd.f32 0.0, %v1550
        %1552 = vdwg.mxu0
        %v1553 = vsel %vm898, %v1534, -inf
        %1554 = vmax.xlane.f32.xlu0 %v1553
        %v1555 = vpop.xlane.xlu0 %1554
        %v1556 = vsel %vm898, %v1536, -inf
        %1557 = vmax.xlane.f32.xlu0 %v1556
        %v1558 = vpop.xlane.xlu0 %1557
        %v1559 = vsel %vm898, %v1539, -inf
        %1560 = vmax.xlane.f32.xlu0 %v1559
        %v1561 = vpop.xlane.xlu0 %1560
        %v1562 = vsel %vm898, %v1541, -inf
        %1563 = vmax.xlane.f32.xlu0 %v1562
        %v1564 = vpop.xlane.xlu0 %1563
        %v1565 = vsel %vm898, %v1544, -inf
        %1566 = vmax.xlane.f32.xlu0 %v1565
        %v1567 = vpop.xlane.xlu0 %1566
        %v1568 = vsel %vm898, %v1546, -inf
        %1569 = vmax.xlane.f32.xlu0 %v1568
        %v1570 = vpop.xlane.xlu0 %1569
        %v1571 = vsel %vm898, %v1549, -inf
        %1572 = vmax.xlane.f32.xlu0 %v1571
        %v1573 = vpop.xlane.xlu0 %1572
        %v1574 = vsel %vm898, %v1551, -inf
        %1575 = vmax.xlane.f32.xlu0 %v1574
        %v1576 = vpop.xlane.xlu0 %1575
        %v1577 = vsub.f32 %v1534, %v1555
        %v1578 = vsub.f32 %v1536, %v1558
        %v1579 = vsub.f32 %v1539, %v1561
        %v1580 = vsub.f32 %v1541, %v1564
        %v1581 = vsub.f32 %v1544, %v1567
        %v1582 = vsub.f32 %v1546, %v1570
        %v1583 = vsub.f32 %v1549, %v1573
        %v1584 = vsub.f32 %v1551, %v1576
        %v1585 = vmul.f32 %v1577, 1.442695
        %v1586 = vpow.pop %v1585
        %v1587 = vmul.f32 %v1578, 1.442695
        %v1588 = vpow.pop %v1587
        %v1589 = vmul.f32 %v1579, 1.442695
        %v1590 = vpow.pop %v1589
        %v1591 = vmul.f32 %v1580, 1.442695
        %v1592 = vpow.pop %v1591
        %v1593 = vmul.f32 %v1581, 1.442695
        %v1594 = vpow.pop %v1593
        %v1595 = vmul.f32 %v1582, 1.442695
        %v1596 = vpow.pop %v1595
        %v1597 = vmul.f32 %v1583, 1.442695
        %v1598 = vpow.pop %v1597
        %v1599 = vmul.f32 %v1584, 1.442695
        %v1600 = vpow.pop %v1599
        %v1601 = vsel %vm898, %v1586, 0.0
        %1602 = vadd.xlane.f32.xlu0 %v1601
        %v1603 = vpop.xlane.xlu0 %1602
        %v1604 = vsel %vm898, %v1588, 0.0
        %1605 = vadd.xlane.f32.xlu0 %v1604
        %v1606 = vpop.xlane.xlu0 %1605
        %v1607 = vsel %vm898, %v1590, 0.0
        %1608 = vadd.xlane.f32.xlu0 %v1607
        %v1609 = vpop.xlane.xlu0 %1608
        %v1610 = vsel %vm898, %v1592, 0.0
        %1611 = vadd.xlane.f32.xlu0 %v1610
        %v1612 = vpop.xlane.xlu0 %1611
        %v1613 = vsel %vm898, %v1594, 0.0
        %1614 = vadd.xlane.f32.xlu0 %v1613
        %v1615 = vpop.xlane.xlu0 %1614
        %v1616 = vsel %vm898, %v1596, 0.0
        %1617 = vadd.xlane.f32.xlu0 %v1616
        %v1618 = vpop.xlane.xlu0 %1617
        %v1619 = vsel %vm898, %v1598, 0.0
        %1620 = vadd.xlane.f32.xlu0 %v1619
        %v1621 = vpop.xlane.xlu0 %1620
        %v1622 = vsel %vm898, %v1600, 0.0
        %1623 = vadd.xlane.f32.xlu0 %v1622
        %v1624 = vpop.xlane.xlu0 %1623
        %v1625 = vrcp.pop %v1603
        %v1626 = vrcp.pop %v1606
        %v1627 = vrcp.pop %v1609
        %v1628 = vrcp.pop %v1612
        %v1629 = vrcp.pop %v1615
        %v1630 = vrcp.pop %v1618
        %v1631 = vrcp.pop %v1621
        %v1632 = vrcp.pop %v1624
        %v1633 = vmul.f32 %v1586, %v1625
        %v1634 = vmul.f32 %v1588, %v1626
        %v1635 = vmul.f32 %v1590, %v1627
        %v1636 = vmul.f32 %v1592, %v1628
        %v1637 = vmul.f32 %v1594, %v1629
        %v1638 = vmul.f32 %v1596, %v1630
        %v1639 = vmul.f32 %v1598, %v1631
        %v1640 = vmul.f32 %v1600, %v1632
        %v1641 = vpack.c.bf16 %v1634, %v1633
        %v1642 = vpack.c.bf16 %v1636, %v1635
        %v1643 = vpack.c.bf16 %v1638, %v1637
        %v1644 = vpack.c.bf16 %v1640, %v1639
        %1645 = vrot.lane.b32.xlu0 %v1007, 104
        %v1646 = vpop.permute.xlu0 %1645
        %1647 = vrot.lane.b32.xlu0 %v1008, 104
        %v1648 = vpop.permute.xlu0 %1647
        %1649 = vrot.lane.b32.xlu0 %v1009, 104
        %v1650 = vpop.permute.xlu0 %1649
        %1651 = vrot.lane.b32.xlu0 %v1010, 104
        %v1652 = vpop.permute.xlu0 %1651
        %v1658 = vsel %vm898, %v1641, 0
        %v1661 = vsel %vm898, %v1642, 0
        %v1664 = vsel %vm898, %v1643, 0
        %v1667 = vsel %vm898, %v1644, 0
        %1669 = vmatpush.bf16.msra.mxu0 0
        %1670 = vmatpush.bf16.msra.mxu0 0
        %1671 = vmatpush.bf16.msra.mxu0 0
        %1672 = vmatpush.bf16.msra.mxu0 0
        %1673 = vmatpush.bf16.msra.mxu0 %v1652
        %1674 = vmatpush.bf16.msra.mxu0 %v1650
        %1675 = vmatpush.bf16.msra.mxu0 %v1648
        %1676 = vmatpush.bf16.msra.mxu0 %v1646
        %1677 = vmatmul.bf16.gmra.mxu0 %v1658
        %v1678 = vpop.f32.mrf.mxu0
        %v1679 = vadd.f32 0.0, %v1678
        %v1680 = vpop.f32.mrf.mxu0
        %v1681 = vadd.f32 0.0, %v1680
        %1682 = vmatmul.bf16.gmra.mxu0 %v1661
        %v1683 = vpop.f32.mrf.mxu0
        %v1684 = vadd.f32 0.0, %v1683
        %v1685 = vpop.f32.mrf.mxu0
        %v1686 = vadd.f32 0.0, %v1685
        %1687 = vmatmul.bf16.gmra.mxu0 %v1664
        %v1688 = vpop.f32.mrf.mxu0
        %v1689 = vadd.f32 0.0, %v1688
        %v1690 = vpop.f32.mrf.mxu0
        %v1691 = vadd.f32 0.0, %v1690
        %1692 = vmatmul.bf16.gmra.mxu0 %v1667
        %v1693 = vpop.f32.mrf.mxu0
        %v1694 = vadd.f32 0.0, %v1693
        %v1695 = vpop.f32.mrf.mxu0
        %v1696 = vadd.f32 0.0, %v1695
        %1697 = vdwg.mxu0
        %1706 = vrot.lane.b32.xlu0 %v1251, 8
        %v1707 = vpop.permute.xlu0 %1706
        %1708 = vrot.lane.b32.xlu0 %v1253, 8
        %v1709 = vpop.permute.xlu0 %1708
        %1710 = vrot.lane.b32.xlu0 %v1256, 8
        %v1711 = vpop.permute.xlu0 %1710
        %1712 = vrot.lane.b32.xlu0 %v1258, 8
        %v1713 = vpop.permute.xlu0 %1712
        %1714 = vrot.lane.b32.xlu0 %v1261, 8
        %v1715 = vpop.permute.xlu0 %1714
        %1716 = vrot.lane.b32.xlu0 %v1263, 8
        %v1717 = vpop.permute.xlu0 %1716
        %1718 = vrot.lane.b32.xlu0 %v1266, 8
        %v1719 = vpop.permute.xlu0 %1718
        %1720 = vrot.lane.b32.xlu0 %v1268, 8
        %v1721 = vpop.permute.xlu0 %1720
        %1738 = vrot.lane.b32.xlu0 %v1465, 16
        %v1739 = vpop.permute.xlu0 %1738
        %1740 = vrot.lane.b32.xlu0 %v1467, 16
        %v1741 = vpop.permute.xlu0 %1740
        %1742 = vrot.lane.b32.xlu0 %v1470, 16
        %v1743 = vpop.permute.xlu0 %1742
        %1744 = vrot.lane.b32.xlu0 %v1472, 16
        %v1745 = vpop.permute.xlu0 %1744
        %1746 = vrot.lane.b32.xlu0 %v1475, 16
        %v1747 = vpop.permute.xlu0 %1746
        %1748 = vrot.lane.b32.xlu0 %v1477, 16
        %v1749 = vpop.permute.xlu0 %1748
        %1750 = vrot.lane.b32.xlu0 %v1480, 16
        %v1751 = vpop.permute.xlu0 %1750
        %1752 = vrot.lane.b32.xlu0 %v1482, 16
        %v1753 = vpop.permute.xlu0 %1752
        %1770 = vrot.lane.b32.xlu0 %v1679, 24
        %v1771 = vpop.permute.xlu0 %1770
        %1772 = vrot.lane.b32.xlu0 %v1681, 24
        %v1773 = vpop.permute.xlu0 %1772
        %1774 = vrot.lane.b32.xlu0 %v1684, 24
        %v1775 = vpop.permute.xlu0 %1774
        %1776 = vrot.lane.b32.xlu0 %v1686, 24
        %v1777 = vpop.permute.xlu0 %1776
        %1778 = vrot.lane.b32.xlu0 %v1689, 24
        %v1779 = vpop.permute.xlu0 %1778
        %1780 = vrot.lane.b32.xlu0 %v1691, 24
        %v1781 = vpop.permute.xlu0 %1780
        %1782 = vrot.lane.b32.xlu0 %v1694, 24
        %v1783 = vpop.permute.xlu0 %1782
        %1784 = vrot.lane.b32.xlu0 %v1696, 24
        %v1785 = vpop.permute.xlu0 %1784
        %v1794 = vsel %vm844, %v1037, %v1707
        %v1795 = vsel %vm844, %v1039, %v1709
        %v1796 = vsel %vm844, %v1042, %v1711
        %v1797 = vsel %vm844, %v1044, %v1713
        %v1798 = vsel %vm844, %v1047, %v1715
        %v1799 = vsel %vm844, %v1049, %v1717
        %v1800 = vsel %vm844, %v1052, %v1719
        %v1801 = vsel %vm844, %v1054, %v1721
        %vm1802 = vcmask 130048
        %v1803 = vsel %vm1802, %v1794, %v1739
        %v1804 = vsel %vm1802, %v1795, %v1741
        %v1805 = vsel %vm1802, %v1796, %v1743
        %v1806 = vsel %vm1802, %v1797, %v1745
        %v1807 = vsel %vm1802, %v1798, %v1747
        %v1808 = vsel %vm1802, %v1799, %v1749
        %v1809 = vsel %vm1802, %v1800, %v1751
        %v1810 = vsel %vm1802, %v1801, %v1753
        %vm1811 = vcmask 195584
        %v1812 = vsel %vm1811, %v1803, %v1771
        %v1813 = vsel %vm1811, %v1804, %v1773
        %v1814 = vsel %vm1811, %v1805, %v1775
        %v1815 = vsel %vm1811, %v1806, %v1777
        %v1816 = vsel %vm1811, %v1807, %v1779
        %v1817 = vsel %vm1811, %v1808, %v1781
        %v1818 = vsel %vm1811, %v1809, %v1783
        %v1819 = vsel %vm1811, %v1810, %v1785
        %v1820 = vpack.c.bf16 %v1813, %v1812
        %v1821 = vpack.c.bf16 %v1815, %v1814
        %v1822 = vpack.c.bf16 %v1817, %v1816
        %v1823 = vpack.c.bf16 %v1819, %v1818
        %v1824 = vld [vmem:[%s4] sm:$0xf]
        %v1825 = vld [vmem:[%s4 + $0x4] sm:$0xf]
        %v1826 = vld [vmem:[%s4 + $0x8] sm:$0xf]
        %v1827 = vld [vmem:[%s4 + $0xc] sm:$0xf]
        %v1828 = vperm.slane %v587, 3
        %v1833 = vunpack.c.l.b16 %v1824
        %v1834 = vunpack.c.l.b16 %v1825
        %v1835 = vunpack.c.l.b16 %v1826
        %v1836 = vunpack.c.l.b16 %v1827
        %v1837 = vpack.c.b16 %v1834, %v1833
        %v1838 = vpack.c.b16 %v1836, %v1835
        %v1842 = vsel %vm605, %v1820, 0
        %v1845 = vsel %vm605, %v1821, 0
        %v1848 = vsel %vm605, %v1822, 0
        %v1851 = vsel %vm605, %v1823, 0
        %1853 = vmatpush.bf16.msra.mxu0 0
        %1854 = vmatpush.bf16.msra.mxu0 0
        %1855 = vmatpush.bf16.msra.mxu0 0
        %1856 = vmatpush.bf16.msra.mxu0 0
        %1857 = vmatpush.bf16.msra.mxu0 0
        %1858 = vmatpush.bf16.msra.mxu0 0
        %1859 = vmatpush.bf16.msra.mxu0 %v1838
        %1860 = vmatpush.bf16.msra.mxu0 %v1837
        %1861 = vmatmul.bf16.gmra.mxu0 %v1842
        %v1862 = vpop.f32.mrf.mxu0
        %v1863 = vadd.f32 %v1828, %v1862
        %v1864 = vpop.f32.mrf.mxu0
        %v1865 = vadd.f32 %v1828, %v1864
        %1866 = vmatmul.bf16.gmra.mxu0 %v1845
        %v1867 = vpop.f32.mrf.mxu0
        %v1868 = vadd.f32 %v1828, %v1867
        %v1869 = vpop.f32.mrf.mxu0
        %v1870 = vadd.f32 %v1828, %v1869
        %1871 = vmatmul.bf16.gmra.mxu0 %v1848
        %v1872 = vpop.f32.mrf.mxu0
        %v1873 = vadd.f32 %v1828, %v1872
        %v1874 = vpop.f32.mrf.mxu0
        %v1875 = vadd.f32 %v1828, %v1874
        %1876 = vmatmul.bf16.gmra.mxu0 %v1851
        %v1877 = vpop.f32.mrf.mxu0
        %v1878 = vadd.f32 %v1828, %v1877
        %v1879 = vpop.f32.mrf.mxu0
        %v1880 = vadd.f32 %v1828, %v1879
        %1881 = vdwg.mxu0
        %v1882 = vadd.f32 %v485, %v1863
        %v1883 = vadd.f32 %v486, %v1865
        %v1884 = vadd.f32 %v487, %v1868
        %v1885 = vadd.f32 %v488, %v1870
        %v1886 = vadd.f32 %v489, %v1873
        %v1887 = vadd.f32 %v490, %v1875
        %v1888 = vadd.f32 %v491, %v1878
        %v1889 = vadd.f32 %v492, %v1880
        %v1890 = vsel %vm605, %v1882, 0.0
        %1891 = vadd.xlane.f32.xlu0 %v1890
        %v1892 = vpop.xlane.xlu0 %1891
        %v1893 = vsel %vm605, %v1883, 0.0
        %1894 = vadd.xlane.f32.xlu0 %v1893
        %v1895 = vpop.xlane.xlu0 %1894
        %v1896 = vsel %vm605, %v1884, 0.0
        %1897 = vadd.xlane.f32.xlu0 %v1896
        %v1898 = vpop.xlane.xlu0 %1897
        %v1899 = vsel %vm605, %v1885, 0.0
        %1900 = vadd.xlane.f32.xlu0 %v1899
        %v1901 = vpop.xlane.xlu0 %1900
        %v1902 = vsel %vm605, %v1886, 0.0
        %1903 = vadd.xlane.f32.xlu0 %v1902
        %v1904 = vpop.xlane.xlu0 %1903
        %v1905 = vsel %vm605, %v1887, 0.0
        %1906 = vadd.xlane.f32.xlu0 %v1905
        %v1907 = vpop.xlane.xlu0 %1906
        %v1908 = vsel %vm605, %v1888, 0.0
        %1909 = vadd.xlane.f32.xlu0 %v1908
        %v1910 = vpop.xlane.xlu0 %1909
        %v1911 = vsel %vm605, %v1889, 0.0
        %1912 = vadd.xlane.f32.xlu0 %v1911
        %v1913 = vpop.xlane.xlu0 %1912
        %v1914 = vrcp.pop 32.0
        %v1915 = vmul.f32 32.0, %v1914
        %v1916 = vsub.f32 1.0, %v1915
        %v1917 = vmul.f32 %v1914, %v1916
        %v1918 = vadd.f32 %v1914, %v1917
        %vm1919 = vweird.f32 %v1914
        %v1920 = vsel %vm1919, %v1914, %v1918
        %v1921 = vmul.f32 %v1892, %v1920
        %v1922 = vmul.f32 %v1895, %v1920
        %v1923 = vmul.f32 %v1898, %v1920
        %v1924 = vmul.f32 %v1901, %v1920
        %v1925 = vmul.f32 %v1904, %v1920
        %v1926 = vmul.f32 %v1907, %v1920
        %v1927 = vmul.f32 %v1910, %v1920
        %v1928 = vmul.f32 %v1913, %v1920
        %v1929 = vsub.f32 %v1882, %v1921
        %v1930 = vsub.f32 %v1883, %v1922
        %v1931 = vsub.f32 %v1884, %v1923
        %v1932 = vsub.f32 %v1885, %v1924
        %v1933 = vsub.f32 %v1886, %v1925
        %v1934 = vsub.f32 %v1887, %v1926
        %v1935 = vsub.f32 %v1888, %v1927
        %v1936 = vsub.f32 %v1889, %v1928
        %v1937 = vmul.f32 %v1929, %v1929
        %v1938 = vmul.f32 %v1930, %v1930
        %v1939 = vmul.f32 %v1931, %v1931
        %v1940 = vmul.f32 %v1932, %v1932
        %v1941 = vmul.f32 %v1933, %v1933
        %v1942 = vmul.f32 %v1934, %v1934
        %v1943 = vmul.f32 %v1935, %v1935
        %v1944 = vmul.f32 %v1936, %v1936
        %v1945 = vsel %vm605, %v1937, 0.0
        %1946 = vadd.xlane.f32.xlu0 %v1945
        %v1947 = vpop.xlane.xlu0 %1946
        %v1948 = vsel %vm605, %v1938, 0.0
        %1949 = vadd.xlane.f32.xlu0 %v1948
        %v1950 = vpop.xlane.xlu0 %1949
        %v1951 = vsel %vm605, %v1939, 0.0
        %1952 = vadd.xlane.f32.xlu0 %v1951
        %v1953 = vpop.xlane.xlu0 %1952
        %v1954 = vsel %vm605, %v1940, 0.0
        %1955 = vadd.xlane.f32.xlu0 %v1954
        %v1956 = vpop.xlane.xlu0 %1955
        %v1957 = vsel %vm605, %v1941, 0.0
        %1958 = vadd.xlane.f32.xlu0 %v1957
        %v1959 = vpop.xlane.xlu0 %1958
        %v1960 = vsel %vm605, %v1942, 0.0
        %1961 = vadd.xlane.f32.xlu0 %v1960
        %v1962 = vpop.xlane.xlu0 %1961
        %v1963 = vsel %vm605, %v1943, 0.0
        %1964 = vadd.xlane.f32.xlu0 %v1963
        %v1965 = vpop.xlane.xlu0 %1964
        %v1966 = vsel %vm605, %v1944, 0.0
        %1967 = vadd.xlane.f32.xlu0 %v1966
        %v1968 = vpop.xlane.xlu0 %1967
        %v1969 = vmul.f32 %v1947, %v1920
        %v1970 = vmul.f32 %v1950, %v1920
        %v1971 = vmul.f32 %v1953, %v1920
        %v1972 = vmul.f32 %v1956, %v1920
        %v1973 = vmul.f32 %v1959, %v1920
        %v1974 = vmul.f32 %v1962, %v1920
        %v1975 = vmul.f32 %v1965, %v1920
        %v1976 = vmul.f32 %v1968, %v1920
        %v1977 = vadd.f32 %v1969, 1e-05
        %v1978 = vadd.f32 %v1970, 1e-05
        %v1979 = vadd.f32 %v1971, 1e-05
        %v1980 = vadd.f32 %v1972, 1e-05
        %v1981 = vadd.f32 %v1973, 1e-05
        %v1982 = vadd.f32 %v1974, 1e-05
        %v1983 = vadd.f32 %v1975, 1e-05
        %v1984 = vadd.f32 %v1976, 1e-05
        %v1985 = vrsqrt.pop %v1977
        %v1986 = vmul.f32 %v1985, %v1977
        %v1987 = vmul.f32 %v1986, %v1985
        %v1988 = vmul.f32 0.5, %v1987
        %v1989 = vsub.f32 1.5, %v1988
        %v1990 = vmul.f32 %v1985, %v1989
        %vm1991 = vweird.f32 %v1977
        %vm1992 = vweird.f32 %v1985
        %vm1993 = vmor %vm1991, %vm1992
        %v1994 = vsel %vm1993, %v1985, %v1990
        %v1995 = vrsqrt.pop %v1978
        %v1996 = vmul.f32 %v1995, %v1978
        %v1997 = vmul.f32 %v1996, %v1995
        %v1998 = vmul.f32 0.5, %v1997
        %v1999 = vsub.f32 1.5, %v1998
        %v2000 = vmul.f32 %v1995, %v1999
        %vm2001 = vweird.f32 %v1978
        %vm2002 = vweird.f32 %v1995
        %vm2003 = vmor %vm2001, %vm2002
        %v2004 = vsel %vm2003, %v1995, %v2000
        %v2005 = vrsqrt.pop %v1979
        %v2006 = vmul.f32 %v2005, %v1979
        %v2007 = vmul.f32 %v2006, %v2005
        %v2008 = vmul.f32 0.5, %v2007
        %v2009 = vsub.f32 1.5, %v2008
        %v2010 = vmul.f32 %v2005, %v2009
        %vm2011 = vweird.f32 %v1979
        %vm2012 = vweird.f32 %v2005
        %vm2013 = vmor %vm2011, %vm2012
        %v2014 = vsel %vm2013, %v2005, %v2010
        %v2015 = vrsqrt.pop %v1980
        %v2016 = vmul.f32 %v2015, %v1980
        %v2017 = vmul.f32 %v2016, %v2015
        %v2018 = vmul.f32 0.5, %v2017
        %v2019 = vsub.f32 1.5, %v2018
        %v2020 = vmul.f32 %v2015, %v2019
        %vm2021 = vweird.f32 %v1980
        %vm2022 = vweird.f32 %v2015
        %vm2023 = vmor %vm2021, %vm2022
        %v2024 = vsel %vm2023, %v2015, %v2020
        %v2025 = vrsqrt.pop %v1981
        %v2026 = vmul.f32 %v2025, %v1981
        %v2027 = vmul.f32 %v2026, %v2025
        %v2028 = vmul.f32 0.5, %v2027
        %v2029 = vsub.f32 1.5, %v2028
        %v2030 = vmul.f32 %v2025, %v2029
        %vm2031 = vweird.f32 %v1981
        %vm2032 = vweird.f32 %v2025
        %vm2033 = vmor %vm2031, %vm2032
        %v2034 = vsel %vm2033, %v2025, %v2030
        %v2035 = vrsqrt.pop %v1982
        %v2036 = vmul.f32 %v2035, %v1982
        %v2037 = vmul.f32 %v2036, %v2035
        %v2038 = vmul.f32 0.5, %v2037
        %v2039 = vsub.f32 1.5, %v2038
        %v2040 = vmul.f32 %v2035, %v2039
        %vm2041 = vweird.f32 %v1982
        %vm2042 = vweird.f32 %v2035
        %vm2043 = vmor %vm2041, %vm2042
        %v2044 = vsel %vm2043, %v2035, %v2040
        %v2045 = vrsqrt.pop %v1983
        %v2046 = vmul.f32 %v2045, %v1983
        %v2047 = vmul.f32 %v2046, %v2045
        %v2048 = vmul.f32 0.5, %v2047
        %v2049 = vsub.f32 1.5, %v2048
        %v2050 = vmul.f32 %v2045, %v2049
        %vm2051 = vweird.f32 %v1983
        %vm2052 = vweird.f32 %v2045
        %vm2053 = vmor %vm2051, %vm2052
        %v2054 = vsel %vm2053, %v2045, %v2050
        %v2055 = vrsqrt.pop %v1984
        %v2056 = vmul.f32 %v2055, %v1984
        %v2057 = vmul.f32 %v2056, %v2055
        %v2058 = vmul.f32 0.5, %v2057
        %v2059 = vsub.f32 1.5, %v2058
        %v2060 = vmul.f32 %v2055, %v2059
        %vm2061 = vweird.f32 %v1984
        %vm2062 = vweird.f32 %v2055
        %vm2063 = vmor %vm2061, %vm2062
        %v2064 = vsel %vm2063, %v2055, %v2060
        %v2065 = vmul.f32 %v1929, %v1994
        %v2066 = vmul.f32 %v1930, %v2004
        %v2067 = vmul.f32 %v1931, %v2014
        %v2068 = vmul.f32 %v1932, %v2024
        %v2069 = vmul.f32 %v1933, %v2034
        %v2070 = vmul.f32 %v1934, %v2044
        %v2071 = vmul.f32 %v1935, %v2054
        %v2072 = vmul.f32 %v1936, %v2064
        %v2073 = vperm.slane %v587, 4
        %v2074 = vmul.f32 %v2065, %v2073
        %v2075 = vmul.f32 %v2066, %v2073
        %v2076 = vmul.f32 %v2067, %v2073
        %v2077 = vmul.f32 %v2068, %v2073
        %v2078 = vmul.f32 %v2069, %v2073
        %v2079 = vmul.f32 %v2070, %v2073
        %v2080 = vmul.f32 %v2071, %v2073
        %v2081 = vmul.f32 %v2072, %v2073
        %v2082 = vperm.slane %v587, 5
        %v2083 = vadd.f32 %v2074, %v2082
        %v2084 = vadd.f32 %v2075, %v2082
        %v2085 = vadd.f32 %v2076, %v2082
        %v2086 = vadd.f32 %v2077, %v2082
        %v2087 = vadd.f32 %v2078, %v2082
        %v2088 = vadd.f32 %v2079, %v2082
        %v2089 = vadd.f32 %v2080, %v2082
        %v2090 = vadd.f32 %v2081, %v2082
        %v2091 = vpack.c.bf16 %v2084, %v2083
        %v2092 = vpack.c.bf16 %v2086, %v2085
        %v2093 = vpack.c.bf16 %v2088, %v2087
        %v2094 = vpack.c.bf16 %v2090, %v2089
        %v2095 = vld [vmem:[#allocation10] sm:$0xf]
        %v2096 = vld [vmem:[#allocation10 + $0x4] sm:$0xf]
        %v2097 = vld [vmem:[#allocation10 + $0x8] sm:$0xf]
        %v2098 = vld [vmem:[#allocation10 + $0xc] sm:$0xf]
        %v2099 = vld [vmem:[%s7] sm:$0x1]
        %v2101 = vperm.slane %v2099, 0
        %v2107 = vunpack.c.l.b16 %v2095
        %v2108 = vunpack.c.l.b16 %v2096
        %v2109 = vunpack.c.l.b16 %v2097
        %v2110 = vunpack.c.l.b16 %v2098
        %v2111 = vpack.c.b16 %v2108, %v2107
        %v2112 = vpack.c.b16 %v2110, %v2109
        %v2116 = vsel %vm605, %v2091, 0
        %v2119 = vsel %vm605, %v2092, 0
        %v2122 = vsel %vm605, %v2093, 0
        %v2125 = vsel %vm605, %v2094, 0
        %2127 = vmatpush.bf16.msra.mxu0 0
        %2128 = vmatpush.bf16.msra.mxu0 0
        %2129 = vmatpush.bf16.msra.mxu0 0
        %2130 = vmatpush.bf16.msra.mxu0 0
        %2131 = vmatpush.bf16.msra.mxu0 0
        %2132 = vmatpush.bf16.msra.mxu0 0
        %2133 = vmatpush.bf16.msra.mxu0 %v2112
        %2134 = vmatpush.bf16.msra.mxu0 %v2111
        %2135 = vmatmul.bf16.gmra.mxu0 %v2116
        %v2136 = vpop.f32.mrf.mxu0
        %v2137 = vadd.f32 %v2101, %v2136
        %v2138 = vpop.f32.mrf.mxu0
        %v2139 = vadd.f32 %v2101, %v2138
        %2140 = vmatmul.bf16.gmra.mxu0 %v2119
        %v2141 = vpop.f32.mrf.mxu0
        %v2142 = vadd.f32 %v2101, %v2141
        %v2143 = vpop.f32.mrf.mxu0
        %v2144 = vadd.f32 %v2101, %v2143
        %2145 = vmatmul.bf16.gmra.mxu0 %v2122
        %v2146 = vpop.f32.mrf.mxu0
        %v2147 = vadd.f32 %v2101, %v2146
        %v2148 = vpop.f32.mrf.mxu0
        %v2149 = vadd.f32 %v2101, %v2148
        %2150 = vmatmul.bf16.gmra.mxu0 %v2125
        %v2151 = vpop.f32.mrf.mxu0
        %v2152 = vadd.f32 %v2101, %v2151
        %v2153 = vpop.f32.mrf.mxu0
        %v2154 = vadd.f32 %v2101, %v2153
        %2155 = vdwg.mxu0
        %v2156 = vmul.f32 %v2137, 0.5
        %v2157 = vmul.f32 %v2139, 0.5
        %v2158 = vmul.f32 %v2142, 0.5
        %v2159 = vmul.f32 %v2144, 0.5
        %v2160 = vmul.f32 %v2147, 0.5
        %v2161 = vmul.f32 %v2149, 0.5
        %v2162 = vmul.f32 %v2152, 0.5
        %v2163 = vmul.f32 %v2154, 0.5
        %v2164 = vmul.f32 %v2137, 0.044715
        %v2165 = vmul.f32 %v2139, 0.044715
        %v2166 = vmul.f32 %v2142, 0.044715
        %v2167 = vmul.f32 %v2144, 0.044715
        %v2168 = vmul.f32 %v2147, 0.044715
        %v2169 = vmul.f32 %v2149, 0.044715
        %v2170 = vmul.f32 %v2152, 0.044715
        %v2171 = vmul.f32 %v2154, 0.044715
        %v2172 = vmul.f32 %v2164, %v2137
        %v2173 = vmul.f32 %v2165, %v2139
        %v2174 = vmul.f32 %v2166, %v2142
        %v2175 = vmul.f32 %v2167, %v2144
        %v2176 = vmul.f32 %v2168, %v2147
        %v2177 = vmul.f32 %v2169, %v2149
        %v2178 = vmul.f32 %v2170, %v2152
        %v2179 = vmul.f32 %v2171, %v2154
        %v2180 = vmul.f32 %v2172, %v2137
        %v2181 = vmul.f32 %v2173, %v2139
        %v2182 = vmul.f32 %v2174, %v2142
        %v2183 = vmul.f32 %v2175, %v2144
        %v2184 = vmul.f32 %v2176, %v2147
        %v2185 = vmul.f32 %v2177, %v2149
        %v2186 = vmul.f32 %v2178, %v2152
        %v2187 = vmul.f32 %v2179, %v2154
        %v2188 = vadd.f32 %v2137, %v2180
        %v2189 = vadd.f32 %v2139, %v2181
        %v2190 = vadd.f32 %v2142, %v2182
        %v2191 = vadd.f32 %v2144, %v2183
        %v2192 = vadd.f32 %v2147, %v2184
        %v2193 = vadd.f32 %v2149, %v2185
        %v2194 = vadd.f32 %v2152, %v2186
        %v2195 = vadd.f32 %v2154, %v2187
        %v2196 = vmul.f32 %v2188, 0.7978846
        %v2197 = vmul.f32 %v2189, 0.7978846
        %v2198 = vmul.f32 %v2190, 0.7978846
        %v2199 = vmul.f32 %v2191, 0.7978846
        %v2200 = vmul.f32 %v2192, 0.7978846
        %v2201 = vmul.f32 %v2193, 0.7978846
        %v2202 = vmul.f32 %v2194, 0.7978846
        %v2203 = vmul.f32 %v2195, 0.7978846
        %v2204 = vtanh.pop %v2196
        %v2205 = vtanh.pop %v2197
        %v2206 = vtanh.pop %v2198
        %v2207 = vtanh.pop %v2199
        %v2208 = vtanh.pop %v2200
        %v2209 = vtanh.pop %v2201
        %v2210 = vtanh.pop %v2202
        %v2211 = vtanh.pop %v2203
        %v2212 = vadd.f32 %v2204, 1.0
        %v2213 = vadd.f32 %v2205, 1.0
        %v2214 = vadd.f32 %v2206, 1.0
        %v2215 = vadd.f32 %v2207, 1.0
        %v2216 = vadd.f32 %v2208, 1.0
        %v2217 = vadd.f32 %v2209, 1.0
        %v2218 = vadd.f32 %v2210, 1.0
        %v2219 = vadd.f32 %v2211, 1.0
        %v2220 = vmul.f32 %v2156, %v2212
        %v2221 = vmul.f32 %v2157, %v2213
        %v2222 = vmul.f32 %v2158, %v2214
        %v2223 = vmul.f32 %v2159, %v2215
        %v2224 = vmul.f32 %v2160, %v2216
        %v2225 = vmul.f32 %v2161, %v2217
        %v2226 = vmul.f32 %v2162, %v2218
        %v2227 = vmul.f32 %v2163, %v2219
        %v2228 = vpack.c.bf16 %v2221, %v2220
        %v2229 = vpack.c.bf16 %v2223, %v2222
        %v2230 = vpack.c.bf16 %v2225, %v2224
        %v2231 = vpack.c.bf16 %v2227, %v2226
        %v2232 = vld [vmem:[%s8] sm:$0xf]
        %v2233 = vld [vmem:[%s8 + $0x4] sm:$0xf]
        %v2234 = vld [vmem:[%s8 + $0x8] sm:$0xf]
        %v2235 = vld [vmem:[%s8 + $0xc] sm:$0xf]
        %v2236 = vld [vmem:[%s8 + $0x10] sm:$0xf]
        %v2237 = vld [vmem:[%s8 + $0x14] sm:$0xf]
        %v2238 = vld [vmem:[%s8 + $0x18] sm:$0xf]
        %v2239 = vld [vmem:[%s8 + $0x1c] sm:$0xf]
        %v2240 = vld [vmem:[%s8 + $0x20] sm:$0xf]
        %v2241 = vld [vmem:[%s8 + $0x24] sm:$0xf]
        %v2242 = vld [vmem:[%s8 + $0x28] sm:$0xf]
        %v2243 = vld [vmem:[%s8 + $0x2c] sm:$0xf]
        %v2244 = vld [vmem:[%s8 + $0x30] sm:$0xf]
        %v2245 = vld [vmem:[%s8 + $0x34] sm:$0xf]
        %v2246 = vld [vmem:[%s8 + $0x38] sm:$0xf]
        %v2247 = vld [vmem:[%s8 + $0x3c] sm:$0xf]
        %v2248 = vperm.slane %v588, 0
        %v2265 = vunpack.c.l.b16 %v2232
        %v2266 = vunpack.c.l.b16 %v2233
        %v2267 = vunpack.c.l.b16 %v2234
        %v2268 = vunpack.c.l.b16 %v2235
        %v2269 = vunpack.c.l.b16 %v2236
        %v2270 = vunpack.c.l.b16 %v2237
        %v2271 = vunpack.c.l.b16 %v2238
        %v2272 = vunpack.c.l.b16 %v2239
        %v2273 = vunpack.c.l.b16 %v2240
        %v2274 = vunpack.c.l.b16 %v2241
        %v2275 = vunpack.c.l.b16 %v2242
        %v2276 = vunpack.c.l.b16 %v2243
        %v2277 = vunpack.c.l.b16 %v2244
        %v2278 = vunpack.c.l.b16 %v2245
        %v2279 = vunpack.c.l.b16 %v2246
        %v2280 = vunpack.c.l.b16 %v2247
        %v2281 = vpack.c.b16 %v2266, %v2265
        %v2282 = vpack.c.b16 %v2268, %v2267
        %v2283 = vpack.c.b16 %v2270, %v2269
        %v2284 = vpack.c.b16 %v2272, %v2271
        %v2285 = vpack.c.b16 %v2274, %v2273
        %v2286 = vpack.c.b16 %v2276, %v2275
        %v2287 = vpack.c.b16 %v2278, %v2277
        %v2288 = vpack.c.b16 %v2280, %v2279
        %2297 = vmatpush.bf16.msra.mxu0 %v2288
        %2298 = vmatpush.bf16.msra.mxu0 %v2287
        %2299 = vmatpush.bf16.msra.mxu0 %v2286
        %2300 = vmatpush.bf16.msra.mxu0 %v2285
        %2301 = vmatpush.bf16.msra.mxu0 %v2284
        %2302 = vmatpush.bf16.msra.mxu0 %v2283
        %2303 = vmatpush.bf16.msra.mxu0 %v2282
        %2304 = vmatpush.bf16.msra.mxu0 %v2281
        %2305 = vmatmul.bf16.gmra.mxu0 %v2228
        %v2306 = vpop.f32.mrf.mxu0
        %v2307 = vadd.f32 %v2248, %v2306
        %v2308 = vpop.f32.mrf.mxu0
        %v2309 = vadd.f32 %v2248, %v2308
        %2310 = vmatmul.bf16.gmra.mxu0 %v2229
        %v2311 = vpop.f32.mrf.mxu0
        %v2312 = vadd.f32 %v2248, %v2311
        %v2313 = vpop.f32.mrf.mxu0
        %v2314 = vadd.f32 %v2248, %v2313
        %2315 = vmatmul.bf16.gmra.mxu0 %v2230
        %v2316 = vpop.f32.mrf.mxu0
        %v2317 = vadd.f32 %v2248, %v2316
        %v2318 = vpop.f32.mrf.mxu0
        %v2319 = vadd.f32 %v2248, %v2318
        %2320 = vmatmul.bf16.gmra.mxu0 %v2231
        %v2321 = vpop.f32.mrf.mxu0
        %v2322 = vadd.f32 %v2248, %v2321
        %v2323 = vpop.f32.mrf.mxu0
        %v2324 = vadd.f32 %v2248, %v2323
        %2325 = vdwg.mxu0
        %v2326 = vadd.f32 %v2083, %v2307
        %v2327 = vadd.f32 %v2084, %v2309
        %v2328 = vadd.f32 %v2085, %v2312
        %v2329 = vadd.f32 %v2086, %v2314
        %v2330 = vadd.f32 %v2087, %v2317
        %v2331 = vadd.f32 %v2088, %v2319
        %v2332 = vadd.f32 %v2089, %v2322
        %v2333 = vadd.f32 %v2090, %v2324
        %v2334 = vsel %vm605, %v2326, 0.0
        %2335 = vadd.xlane.f32.xlu0 %v2334
        %v2336 = vpop.xlane.xlu0 %2335
        %v2337 = vsel %vm605, %v2327, 0.0
        %2338 = vadd.xlane.f32.xlu0 %v2337
        %v2339 = vpop.xlane.xlu0 %2338
        %v2340 = vsel %vm605, %v2328, 0.0
        %2341 = vadd.xlane.f32.xlu0 %v2340
        %v2342 = vpop.xlane.xlu0 %2341
        %v2343 = vsel %vm605, %v2329, 0.0
        %2344 = vadd.xlane.f32.xlu0 %v2343
        %v2345 = vpop.xlane.xlu0 %2344
        %v2346 = vsel %vm605, %v2330, 0.0
        %2347 = vadd.xlane.f32.xlu0 %v2346
        %v2348 = vpop.xlane.xlu0 %2347
        %v2349 = vsel %vm605, %v2331, 0.0
        %2350 = vadd.xlane.f32.xlu0 %v2349
        %v2351 = vpop.xlane.xlu0 %2350
        %v2352 = vsel %vm605, %v2332, 0.0
        %2353 = vadd.xlane.f32.xlu0 %v2352
        %v2354 = vpop.xlane.xlu0 %2353
        %v2355 = vsel %vm605, %v2333, 0.0
        %2356 = vadd.xlane.f32.xlu0 %v2355
        %v2357 = vpop.xlane.xlu0 %2356
        %v2358 = vmul.f32 %v2336, %v1920
        %v2359 = vmul.f32 %v2339, %v1920
        %v2360 = vmul.f32 %v2342, %v1920
        %v2361 = vmul.f32 %v2345, %v1920
        %v2362 = vmul.f32 %v2348, %v1920
        %v2363 = vmul.f32 %v2351, %v1920
        %v2364 = vmul.f32 %v2354, %v1920
        %v2365 = vmul.f32 %v2357, %v1920
        %v2366 = vsub.f32 %v2326, %v2358
        %v2367 = vsub.f32 %v2327, %v2359
        %v2368 = vsub.f32 %v2328, %v2360
        %v2369 = vsub.f32 %v2329, %v2361
        %v2370 = vsub.f32 %v2330, %v2362
        %v2371 = vsub.f32 %v2331, %v2363
        %v2372 = vsub.f32 %v2332, %v2364
        %v2373 = vsub.f32 %v2333, %v2365
        %v2374 = vmul.f32 %v2366, %v2366
        %v2375 = vmul.f32 %v2367, %v2367
        %v2376 = vmul.f32 %v2368, %v2368
        %v2377 = vmul.f32 %v2369, %v2369
        %v2378 = vmul.f32 %v2370, %v2370
        %v2379 = vmul.f32 %v2371, %v2371
        %v2380 = vmul.f32 %v2372, %v2372
        %v2381 = vmul.f32 %v2373, %v2373
        %v2382 = vsel %vm605, %v2374, 0.0
        %2383 = vadd.xlane.f32.xlu0 %v2382
        %v2384 = vpop.xlane.xlu0 %2383
        %v2385 = vsel %vm605, %v2375, 0.0
        %2386 = vadd.xlane.f32.xlu0 %v2385
        %v2387 = vpop.xlane.xlu0 %2386
        %v2388 = vsel %vm605, %v2376, 0.0
        %2389 = vadd.xlane.f32.xlu0 %v2388
        %v2390 = vpop.xlane.xlu0 %2389
        %v2391 = vsel %vm605, %v2377, 0.0
        %2392 = vadd.xlane.f32.xlu0 %v2391
        %v2393 = vpop.xlane.xlu0 %2392
        %v2394 = vsel %vm605, %v2378, 0.0
        %2395 = vadd.xlane.f32.xlu0 %v2394
        %v2396 = vpop.xlane.xlu0 %2395
        %v2397 = vsel %vm605, %v2379, 0.0
        %2398 = vadd.xlane.f32.xlu0 %v2397
        %v2399 = vpop.xlane.xlu0 %2398
        %v2400 = vsel %vm605, %v2380, 0.0
        %2401 = vadd.xlane.f32.xlu0 %v2400
        %v2402 = vpop.xlane.xlu0 %2401
        %v2403 = vsel %vm605, %v2381, 0.0
        %2404 = vadd.xlane.f32.xlu0 %v2403
        %v2405 = vpop.xlane.xlu0 %2404
        %v2406 = vmul.f32 %v2384, %v1920
        %v2407 = vmul.f32 %v2387, %v1920
        %v2408 = vmul.f32 %v2390, %v1920
        %v2409 = vmul.f32 %v2393, %v1920
        %v2410 = vmul.f32 %v2396, %v1920
        %v2411 = vmul.f32 %v2399, %v1920
        %v2412 = vmul.f32 %v2402, %v1920
        %v2413 = vmul.f32 %v2405, %v1920
        %v2414 = vadd.f32 %v2406, 1e-05
        %v2415 = vadd.f32 %v2407, 1e-05
        %v2416 = vadd.f32 %v2408, 1e-05
        %v2417 = vadd.f32 %v2409, 1e-05
        %v2418 = vadd.f32 %v2410, 1e-05
        %v2419 = vadd.f32 %v2411, 1e-05
        %v2420 = vadd.f32 %v2412, 1e-05
        %v2421 = vadd.f32 %v2413, 1e-05
        %v2422 = vrsqrt.pop %v2414
        %v2423 = vmul.f32 %v2422, %v2414
        %v2424 = vmul.f32 %v2423, %v2422
        %v2425 = vmul.f32 0.5, %v2424
        %v2426 = vsub.f32 1.5, %v2425
        %v2427 = vmul.f32 %v2422, %v2426
        %vm2428 = vweird.f32 %v2414
        %vm2429 = vweird.f32 %v2422
        %vm2430 = vmor %vm2428, %vm2429
        %v2431 = vsel %vm2430, %v2422, %v2427
        %v2432 = vrsqrt.pop %v2415
        %v2433 = vmul.f32 %v2432, %v2415
        %v2434 = vmul.f32 %v2433, %v2432
        %v2435 = vmul.f32 0.5, %v2434
        %v2436 = vsub.f32 1.5, %v2435
        %v2437 = vmul.f32 %v2432, %v2436
        %vm2438 = vweird.f32 %v2415
        %vm2439 = vweird.f32 %v2432
        %vm2440 = vmor %vm2438, %vm2439
        %v2441 = vsel %vm2440, %v2432, %v2437
        %v2442 = vrsqrt.pop %v2416
        %v2443 = vmul.f32 %v2442, %v2416
        %v2444 = vmul.f32 %v2443, %v2442
        %v2445 = vmul.f32 0.5, %v2444
        %v2446 = vsub.f32 1.5, %v2445
        %v2447 = vmul.f32 %v2442, %v2446
        %vm2448 = vweird.f32 %v2416
        %vm2449 = vweird.f32 %v2442
        %vm2450 = vmor %vm2448, %vm2449
        %v2451 = vsel %vm2450, %v2442, %v2447
        %v2452 = vrsqrt.pop %v2417
        %v2453 = vmul.f32 %v2452, %v2417
        %v2454 = vmul.f32 %v2453, %v2452
        %v2455 = vmul.f32 0.5, %v2454
        %v2456 = vsub.f32 1.5, %v2455
        %v2457 = vmul.f32 %v2452, %v2456
        %vm2458 = vweird.f32 %v2417
        %vm2459 = vweird.f32 %v2452
        %vm2460 = vmor %vm2458, %vm2459
        %v2461 = vsel %vm2460, %v2452, %v2457
        %v2462 = vrsqrt.pop %v2418
        %v2463 = vmul.f32 %v2462, %v2418
        %v2464 = vmul.f32 %v2463, %v2462
        %v2465 = vmul.f32 0.5, %v2464
        %v2466 = vsub.f32 1.5, %v2465
        %v2467 = vmul.f32 %v2462, %v2466
        %vm2468 = vweird.f32 %v2418
        %vm2469 = vweird.f32 %v2462
        %vm2470 = vmor %vm2468, %vm2469
        %v2471 = vsel %vm2470, %v2462, %v2467
        %v2472 = vrsqrt.pop %v2419
        %v2473 = vmul.f32 %v2472, %v2419
        %v2474 = vmul.f32 %v2473, %v2472
        %v2475 = vmul.f32 0.5, %v2474
        %v2476 = vsub.f32 1.5, %v2475
        %v2477 = vmul.f32 %v2472, %v2476
        %vm2478 = vweird.f32 %v2419
        %vm2479 = vweird.f32 %v2472
        %vm2480 = vmor %vm2478, %vm2479
        %v2481 = vsel %vm2480, %v2472, %v2477
        %v2482 = vrsqrt.pop %v2420
        %v2483 = vmul.f32 %v2482, %v2420
        %v2484 = vmul.f32 %v2483, %v2482
        %v2485 = vmul.f32 0.5, %v2484
        %v2486 = vsub.f32 1.5, %v2485
        %v2487 = vmul.f32 %v2482, %v2486
        %vm2488 = vweird.f32 %v2420
        %vm2489 = vweird.f32 %v2482
        %vm2490 = vmor %vm2488, %vm2489
        %v2491 = vsel %vm2490, %v2482, %v2487
        %v2492 = vrsqrt.pop %v2421
        %v2493 = vmul.f32 %v2492, %v2421
        %v2494 = vmul.f32 %v2493, %v2492
        %v2495 = vmul.f32 0.5, %v2494
        %v2496 = vsub.f32 1.5, %v2495
        %v2497 = vmul.f32 %v2492, %v2496
        %vm2498 = vweird.f32 %v2421
        %vm2499 = vweird.f32 %v2492
        %vm2500 = vmor %vm2498, %vm2499
        %v2501 = vsel %vm2500, %v2492, %v2497
        %v2502 = vmul.f32 %v2366, %v2431
        %v2503 = vmul.f32 %v2367, %v2441
        %v2504 = vmul.f32 %v2368, %v2451
        %v2505 = vmul.f32 %v2369, %v2461
        %v2506 = vmul.f32 %v2370, %v2471
        %v2507 = vmul.f32 %v2371, %v2481
        %v2508 = vmul.f32 %v2372, %v2491
        %v2509 = vmul.f32 %v2373, %v2501
        %v2510 = vperm.slane %v587, 6
        %v2511 = vmul.f32 %v2502, %v2510
        %v2512 = vmul.f32 %v2503, %v2510
        %v2513 = vmul.f32 %v2504, %v2510
        %v2514 = vmul.f32 %v2505, %v2510
        %v2515 = vmul.f32 %v2506, %v2510
        %v2516 = vmul.f32 %v2507, %v2510
        %v2517 = vmul.f32 %v2508, %v2510
        %v2518 = vmul.f32 %v2509, %v2510
        %v2519 = vperm.slane %v587, 7
        %v2520 = vadd.f32 %v2511, %v2519
        %v2521 = vadd.f32 %v2512, %v2519
        %v2522 = vadd.f32 %v2513, %v2519
        %v2523 = vadd.f32 %v2514, %v2519
        %v2524 = vadd.f32 %v2515, %v2519
        %v2525 = vadd.f32 %v2516, %v2519
        %v2526 = vadd.f32 %v2517, %v2519
        %v2527 = vadd.f32 %v2518, %v2519
        %2528 = vxpose.xlu0.b32.start [1/16] %v2520, 128
        %2529 = vxpose.xlu0.b32.cont [2/16] %v2521, 128
        %2530 = vxpose.xlu0.b32.cont [3/16] %v2522, 128
        %2531 = vxpose.xlu0.b32.cont [4/16] %v2523, 128
        %2532 = vxpose.xlu0.b32.cont [5/16] %v2524, 128
        %2533 = vxpose.xlu0.b32.cont [6/16] %v2525, 128
        %2534 = vxpose.xlu0.b32.cont [7/16] %v2526, 128
        %2535 = vxpose.xlu0.b32.cont [8/16] %v2527, 128
        %2536 = vxpose.xlu0.b32.cont [9/16] 0.0, 128
        %2537 = vxpose.xlu0.b32.cont [10/16] 0.0, 128
        %2538 = vxpose.xlu0.b32.cont [11/16] 0.0, 128
        %2539 = vxpose.xlu0.b32.cont [12/16] 0.0, 128
        %2540 = vxpose.xlu0.b32.cont [13/16] 0.0, 128
        %2541 = vxpose.xlu0.b32.cont [14/16] 0.0, 128
        %2542 = vxpose.xlu0.b32.cont [15/16] 0.0, 128
        %2543 = vxpose.xlu0.b32.end [16/16] 0.0, 128
        %v2544 = vpop.trf.xlu0
        %v2545 = vpop.trf.xlu0
        %v2546 = vpop.trf.xlu0
        %v2547 = vpop.trf.xlu0
        %v2548 = vpop.trf.xlu0
        %v2549 = vpop.trf.xlu0
        %v2550 = vpop.trf.xlu0
        %v2551 = vpop.trf.xlu0
        %v2552 = vpop.trf.xlu0
        %v2553 = vpop.trf.xlu0
        %v2554 = vpop.trf.xlu0
        %v2555 = vpop.trf.xlu0
        %v2556 = vpop.trf.xlu0
        %v2557 = vpop.trf.xlu0
        %v2558 = vpop.trf.xlu0
        %v2559 = vpop.trf.xlu0
        %2560 = vst.msk [vmem:[%s458] sm:$0xff] %vm898, %v2544
        %2561 = vst.msk [vmem:[%s458 + $0x8] sm:$0xff] %vm898, %v2545
        %2562 = vst.msk [vmem:[%s458 + $0x10] sm:$0xff] %vm898, %v2546
        %2563 = vst.msk [vmem:[%s458 + $0x18] sm:$0xff] %vm898, %v2547
        %s2564 = sand.u32 %s242, 1
        %s2565 = scalar_lea.sflag [#allocation4], %s2564
        %s2566 = sand.u32 %s242, 1
        %s2567 = smul.addr %s2566, 32
        %s2568 = scalar_lea.vmem [#allocation11], %s2567
        // Predicated region
        $region77: #{tpu_custom_call.1} parent=55 // pred_check
          %p2569 = pneg %p252
        $region78: #{tpu_custom_call.1} parent=55 // pred_check_branch
          %2571 = sbr.rel (%p2569) target = $region80
        $region79: #{tpu_custom_call.1} parent=55 // pred_region
          %2573 = vsyncadd %s2565, 0
          %s2574 = smul.addr %s30, 4
          %s2575 = smul.addr %s2574, 8
          %s2576 = scalar_lea.hbm %s9, %s2575
          %s2577 = sshll.u32 %s2568, 4
          %s2578 = int_to_ptr.vmem [resolvable:$true] %s2577
          %s2579 = sshll.u32 %s2576, 4
          %s2580 = int_to_ptr.hbm [resolvable:$true] %s2579
          %2585 = dma.vmem_to_hbm [thread:$0]  %s2578, 512, %s2580, %s2565, 128, 128, 8
        $region80: #{tpu_custom_call.1} parent=55 // pred_fallthru
          _
      $region56: #{tpu_custom_call.1} parent=5 // pred_fallthru
        _
      %p2586 = scmp.le.s32.totalorder 2, %s25
      // Predicated region
      $region81: #{tpu_custom_call.1} parent=5 // pred_check
        %p2587 = pneg %p2586
      $region82: #{tpu_custom_call.1} parent=5 // pred_check_branch
        %2589 = sbr.rel (%p2587) target = $region84
      $region83: #{tpu_custom_call.1} parent=5 // pred_region
        %s2590 = ssub.s32 %s25, 2
        // Predicated region
        $region85: #{tpu_custom_call.1} parent=83 // pred_check
          %p2591 = pneg %p258
        $region86: #{tpu_custom_call.1} parent=83 // pred_check_branch
          %2593 = sbr.rel (%p2591) target = $region88
        $region87: #{tpu_custom_call.1} parent=83 // pred_region
          %s2594 = sand.u32 %s243, 1
          %s2595 = scalar_lea.sflag [#allocation4], %s2594
          %s2596 = sand.u32 %s243, 1
          %s2597 = smul.addr %s2596, 32
          %s2598 = scalar_lea.vmem [#allocation11], %s2597
          %2600 = dma.done %s2595, 512
        $region88: #{tpu_custom_call.1} parent=83 // pred_fallthru
          _
      $region84: #{tpu_custom_call.1} parent=5 // pred_fallthru
        _
    $region6: #{tpu_custom_call.1} parent=1 // loop_footer
      %s29 = sadd.s32 1, %s25
    $region7: #{tpu_custom_call.1} parent=1 // loop_footer_branch
      %24 = sbr.rel target = $region3
    $region8: #{tpu_custom_call.1} parent=1 // loop_exit
      _
    %2601 = vsyncpa [#allocation3], 1
    %s2602 = scalar_lea.sflag [#allocation3], 1
    %2603 = vsyncpa %s2602, 1
    %2604 = vsyncpa [#allocation6], 1
    %s2605 = scalar_lea.sflag [#allocation6], 1
    %2606 = vsyncpa %s2605, 1
    %2607 = vsyncpa [#allocation9], 1
    %2608 = vsyncpa [#allocation4], 1
    %s2609 = scalar_lea.sflag [#allocation4], 1
    %2610 = vsyncpa %s2609, 1

</llo_original>
